<compile_context>
chip_gen: v7x
topology: tpu7x:2x2x1
jax: 0.10.0
libtpu: 0.0.40
codegen_flags: <defaults>
</compile_context>

<pallas_src>
import functools

import jax
import jax.numpy as jnp
from jax import lax
from jax.experimental import pallas as pl
from jax.experimental.pallas import tpu as pltpu

LANE = 128


def _propagate(x_ref, a_ref, acc_ref, *, tile_k):
    """acc (+)= A_tile @ X_chunk, bf16 x bf16 -> f32 accumulate on the MXU."""
    j = pl.program_id(1)

    @pl.when(j == 0)
    def _():
        acc_ref[...] = jnp.zeros_like(acc_ref)

    jj = pl.multiple_of(j * tile_k, tile_k)
    x_chunk = x_ref[pl.ds(jj, tile_k), :]                 # bf16 [tile_k, f_pad]
    acc_ref[...] += jnp.dot(a_ref[...], x_chunk,          # bf16 x bf16 -> f32
                            preferred_element_type=jnp.float32)


def _hop_kernel(x_ref, a_ref, o_ref, acc_ref, *, tile_k):
    """One propagation hop: O[i] = sum_j A[i,j] @ X[j]  (bf16 feature output)."""
    _propagate(x_ref, a_ref, acc_ref, tile_k=tile_k)

    @pl.when(pl.program_id(1) == pl.num_programs(1) - 1)
    def _():
        o_ref[...] = acc_ref[...].astype(o_ref.dtype)


def _final_hop_kernel(x_ref, a_ref, w_ref, b_ref, o_ref, acc_ref, *, C, tile_k):
    """Last hop fused with (folded) linear + masked log_softmax epilogue."""
    _propagate(x_ref, a_ref, acc_ref, tile_k=tile_k)

    @pl.when(pl.program_id(1) == pl.num_programs(1) - 1)
    def _():
        h = acc_ref[...]                                   # f32 [tile_n, f_pad]
        # Epilogue matmul is tiny (tile_n x 128 x 128) -> keep it in f32.
        z = jnp.dot(h, w_ref[...], preferred_element_type=jnp.float32) + b_ref[...]
        col = lax.broadcasted_iota(jnp.int32, z.shape, 1)
        z = jnp.where(col < C, z, -1e30)                   # mask padded classes
        m = jnp.max(z, axis=-1, keepdims=True)
        s = z - m
        lse = jnp.log(jnp.sum(jnp.exp(s), axis=-1, keepdims=True))
        o_ref[...] = (s - lse).astype(o_ref.dtype)


def _hop_call(h_bf, adj_bf, *, tile_n, tile_k, f_pad):
    N = adj_bf.shape[0]
    grid = (N // tile_n, N // tile_k)
    return pl.pallas_call(
        functools.partial(_hop_kernel, tile_k=tile_k),
        out_shape=jax.ShapeDtypeStruct((N, f_pad), jnp.bfloat16),
        grid_spec=pltpu.PrefetchScalarGridSpec(
            num_scalar_prefetch=0,
            grid=grid,
            in_specs=[
                pl.BlockSpec((N, f_pad), lambda i, j: (0, 0)),        # resident features
                pl.BlockSpec((tile_n, tile_k), lambda i, j: (i, j)),  # bf16 A tiles
            ],
            out_specs=pl.BlockSpec((tile_n, f_pad), lambda i, j: (i, 0)),
            scratch_shapes=[pltpu.VMEM((tile_n, f_pad), jnp.float32)],
        ),
        compiler_params=pltpu.CompilerParams(
            dimension_semantics=("parallel", "arbitrary"),
            vmem_limit_bytes=32 * 1024 * 1024,
        ),
        cost_estimate=pl.CostEstimate(
            flops=2 * N * N * f_pad,
            transcendentals=0,
            bytes_accessed=N * N * 2 + 2 * N * f_pad * 2,
        ),
    )(h_bf, adj_bf)


def _final_call(h_bf, adj_bf, w_p, b_p, *, tile_n, tile_k, f_pad, c_pad, C):
    N = adj_bf.shape[0]
    grid = (N // tile_n, N // tile_k)
    return pl.pallas_call(
        functools.partial(_final_hop_kernel, C=C, tile_k=tile_k),
        out_shape=jax.ShapeDtypeStruct((N, c_pad), jnp.float32),
        grid_spec=pltpu.PrefetchScalarGridSpec(
            num_scalar_prefetch=0,
            grid=grid,
            in_specs=[
                pl.BlockSpec((N, f_pad), lambda i, j: (0, 0)),        # resident features
                pl.BlockSpec((tile_n, tile_k), lambda i, j: (i, j)),  # bf16 A tiles
                pl.BlockSpec((f_pad, c_pad), lambda i, j: (0, 0)),    # fused W
                pl.BlockSpec((1, c_pad), lambda i, j: (0, 0)),        # fused b
            ],
            out_specs=pl.BlockSpec((tile_n, c_pad), lambda i, j: (i, 0)),
            scratch_shapes=[pltpu.VMEM((tile_n, f_pad), jnp.float32)],
        ),
        compiler_params=pltpu.CompilerParams(
            dimension_semantics=("parallel", "arbitrary"),
            vmem_limit_bytes=32 * 1024 * 1024,
        ),
        cost_estimate=pl.CostEstimate(
            flops=2 * N * N * f_pad + 2 * N * f_pad * c_pad,
            transcendentals=N * c_pad + N,
            bytes_accessed=N * N * 2 + N * f_pad * 2 + N * c_pad * 4
            + f_pad * c_pad * 4,
        ),
    )(h_bf, adj_bf, w_p, b_p)


def sgc_forward(x, adj, w_conv, b_conv, w_lin, b_lin, *, K, tile_n=256, tile_k=256):
    """x: [N, Fin], adj: [N, N]; weights stored as [in, out] ([1, out] biases)."""
    N, f_in = x.shape
    C = w_lin.shape[1]
    assert K >= 1
    tile_n = min(tile_n, N)
    tile_k = min(tile_k, N)
    assert N % tile_n == 0 and N % tile_k == 0, "N must be divisible by the tile sizes"

    f_pad = -(-f_in // LANE) * LANE
    c_pad = -(-C // LANE) * LANE

    # Fold the two linears (exact: dropout is identity at inference, no nonlinearity).
    hp = lax.Precision.HIGHEST
    w_fused = jnp.dot(w_conv, w_lin, precision=hp).astype(jnp.float32)          # [Fin, C]
    b_fused = (jnp.dot(b_conv, w_lin, precision=hp) + b_lin).astype(jnp.float32)  # [1, C]

    # Lane-pad features / classes to 128; stream features and A in bf16.
    x_p = jnp.pad(x.astype(jnp.float32), ((0, 0), (0, f_pad - f_in))).astype(jnp.bfloat16)
    w_p = jnp.pad(w_fused, ((0, f_pad - f_in), (0, c_pad - C)))
    b_p = jnp.pad(b_fused, ((0, 0), (0, c_pad - C)))
    adj_bf = adj.astype(jnp.bfloat16)

    h = x_p
    for _ in range(K - 1):
        h = _hop_call(h, adj_bf, tile_n=tile_n, tile_k=tile_k, f_pad=f_pad)
    out_p = _final_call(h, adj_bf, w_p, b_p,
                        tile_n=tile_n, tile_k=tile_k, f_pad=f_pad, c_pad=c_pad, C=C)
    return out_p[:, :C]


def reference(x, adj, w_conv, b_conv, w_lin, b_lin, *, K):
    """Pure-JAX reference that mimics the kernel's bf16 A / bf16 inter-hop features."""
    hp = lax.Precision.HIGHEST
    adj_bf = adj.astype(jnp.bfloat16)
    h = x.astype(jnp.float32)
    for k in range(K):
        h = jnp.dot(adj_bf, h.astype(jnp.bfloat16),
                    preferred_element_type=jnp.float32)
        if k < K - 1:
            h = h.astype(jnp.bfloat16).astype(jnp.float32)   # bf16 inter-hop storage
    h = jnp.dot(h, w_conv, precision=hp) + b_conv
    z = jnp.dot(h, w_lin, precision=hp) + b_lin
    return jax.nn.log_softmax(z, axis=-1)


if __name__ == "__main__":
    # Small, SGC-consistent shapes (big enough to exercise 128/256-wide tiling).
    N = 256              # number of graph nodes
    in_channels = 8
    hidden_channels = 32
    out_channels = 8
    K = 3
    dropout = 0.5        # inference -> identity

    key = jax.random.PRNGKey(0)
    k1, k2, k3, k4, k5, k6 = jax.random.split(key, 6)

    # Node features and a row-normalized dense adjacency.
    x = 2.0 * jax.random.normal(k1, (N, in_channels), dtype=jnp.float32)
    a_raw = jax.random.uniform(k2, (N, N), dtype=jnp.float32)
    adj = a_raw / jnp.sum(a_raw, axis=-1, keepdims=True)

    # Deterministic parameter init (shapes from __init__); stored as [in, out].
    w_conv = jax.random.normal(k3, (in_channels, hidden_channels), jnp.float32) * 0.2
    b_conv = jax.random.normal(k4, (1, hidden_channels), jnp.float32) * 0.02
    w_lin = jax.random.normal(k5, (hidden_channels, out_channels), jnp.float32) * 0.2
    b_lin = jax.random.normal(k6, (1, out_channels), jnp.float32) * 0.02

    fwd = jax.jit(functools.partial(sgc_forward, K=K))
    out = fwd(x, adj, w_conv, b_conv, w_lin, b_lin)
    out = jax.block_until_ready(out)

    ref = reference(x, adj, w_conv, b_conv, w_lin, b_lin, K=K)
    assert out.shape == (N, out_channels)
    max_err = jnp.max(jnp.abs(out - ref))
    assert jnp.allclose(out, ref, atol=2e-3, rtol=2e-3), f"mismatch vs reference: {max_err}"

    print("KERNEL_OK")
</pallas_src>

<mosaic_0001>
module attributes {stable_mosaic.version = 11 : i64} {
  func.func @_hop_kernel(%arg0: i32, %arg1: i32, %arg2: memref<256x128xbf16, #tpu.memory_space<vmem>>, %arg3: memref<256x256xbf16, #tpu.memory_space<vmem>>, %arg4: memref<256x128xbf16, #tpu.memory_space<vmem>>, %arg5: memref<256x128xf32, #tpu.memory_space<vmem>>) attributes {dimension_semantics = [#tpu.dimension_semantics<parallel>, #tpu.dimension_semantics<arbitrary>], iteration_bounds = array<i64: 1, 1>, scalar_prefetch = 0 : i64, scratch_operands = 1 : i64, tpu.core_type = #tpu.core_type<tc>, window_params = [{pipeline_mode = #tpu.pipeline_mode<synchronous>, transform_indices = @transform_0, window_bounds = array<i64: 256, 128>}, {transform_indices = @transform_1, window_bounds = array<i64: 256, 256>}, {transform_indices = @transform_2, window_bounds = array<i64: 256, 128>}]} {
    %c0_i32 = arith.constant 0 : i32
    %0 = arith.cmpi eq, %arg1, %c0_i32 : i32
    %1 = arith.extui %0 : i1 to i32
    %c0_i32_0 = arith.constant 0 : i32
    %2 = arith.cmpi ne, %1, %c0_i32_0 : i32
    scf.if %2 {
      %cst_9 = arith.constant 0.000000e+00 : f32
      %15 = vector.broadcast %cst_9 : f32 to vector<256x128xf32>
      %c0_10 = arith.constant 0 : index
      %c0_11 = arith.constant 0 : index
      %16 = vector.load %arg5[%c0_10, %c0_11] : memref<256x128xf32, #tpu.memory_space<vmem>>, vector<256x128xf32>
      tpu.vector_store %arg5[%c0_10, %c0_11], %15 {strides = array<i32>} : memref<256x128xf32, #tpu.memory_space<vmem>>, vector<256x128xf32>,
    } else {
    }
    %c256_i32 = arith.constant 256 : i32
    %3 = arith.muli %arg1, %c256_i32 : i32
    %4 = tpu.assume_multiple %3, 256 : i32
    %5 = arith.index_cast %4 : i32 to index
    %c0 = arith.constant 0 : index
    %6 = vector.load %arg2[%5, %c0] : memref<256x128xbf16, #tpu.memory_space<vmem>>, vector<256x128xbf16>
    %c0_1 = arith.constant 0 : index
    %c0_2 = arith.constant 0 : index
    %7 = vector.load %arg5[%c0_1, %c0_2] : memref<256x128xf32, #tpu.memory_space<vmem>>, vector<256x128xf32>
    %c0_3 = arith.constant 0 : index
    %c0_4 = arith.constant 0 : index
    %8 = vector.load %arg3[%c0_3, %c0_4] : memref<256x256xbf16, #tpu.memory_space<vmem>>, vector<256x256xbf16>
    %cst = arith.constant dense<0.000000e+00> : vector<256x128xf32>
    %9 = tpu.matmul %8, %6, %cst {dimension_numbers = #tpu.dot_dimension_numbers<[1], [0], [0], [1], [0, 0, 1, 1], [], []>} : vector<256x256xbf16>, vector<256x128xbf16>, vector<256x128xf32> -> vector<256x128xf32>
    %10 = arith.addf %7, %9 : vector<256x128xf32>
    %c0_5 = arith.constant 0 : index
    %c0_6 = arith.constant 0 : index
    %11 = vector.load %arg5[%c0_5, %c0_6] : memref<256x128xf32, #tpu.memory_space<vmem>>, vector<256x128xf32>
    tpu.vector_store %arg5[%c0_5, %c0_6], %10 {strides = array<i32>} : memref<256x128xf32, #tpu.memory_space<vmem>>, vector<256x128xf32>,
    %c0_i32_7 = arith.constant 0 : i32
    %12 = arith.cmpi eq, %arg1, %c0_i32_7 : i32
    %13 = arith.extui %12 : i1 to i32
    %c0_i32_8 = arith.constant 0 : i32
    %14 = arith.cmpi ne, %13, %c0_i32_8 : i32
    scf.if %14 {
      %c0_9 = arith.constant 0 : index
      %c0_10 = arith.constant 0 : index
      %15 = vector.load %arg5[%c0_9, %c0_10] : memref<256x128xf32, #tpu.memory_space<vmem>>, vector<256x128xf32>
      %16 = arith.truncf %15 : vector<256x128xf32> to vector<256x128xbf16>
      %c0_11 = arith.constant 0 : index
      %c0_12 = arith.constant 0 : index
      %17 = vector.load %arg4[%c0_11, %c0_12] : memref<256x128xbf16, #tpu.memory_space<vmem>>, vector<256x128xbf16>
      tpu.vector_store %arg4[%c0_11, %c0_12], %16 {strides = array<i32>} : memref<256x128xbf16, #tpu.memory_space<vmem>>, vector<256x128xbf16>,
    } else {
    }
    return
  }
  func.func @transform_0(%arg0: i32, %arg1: i32) -> (i32, i32) {
    %c0_i32 = arith.constant 0 : i32
    %c0_i32_0 = arith.constant 0 : i32
    %c0_i32_1 = arith.constant 0 : i32
    return %c0_i32, %c0_i32_0 : i32, i32
  }
  func.func @transform_1(%arg0: i32, %arg1: i32) -> (i32, i32) {
    %c0_i32 = arith.constant 0 : i32
    return %arg0, %arg1 : i32, i32
  }
  func.func @transform_2(%arg0: i32, %arg1: i32) -> (i32, i32) {
    %c0_i32 = arith.constant 0 : i32
    %c0_i32_0 = arith.constant 0 : i32
    return %arg0, %c0_i32 : i32, i32
  }
}

module attributes {stable_mosaic.version = 11 : i64} {
  func.func @_final_hop_kernel(%arg0: i32, %arg1: i32, %arg2: memref<256x128xbf16, #tpu.memory_space<vmem>>, %arg3: memref<256x256xbf16, #tpu.memory_space<vmem>>, %arg4: memref<128x128xf32, #tpu.memory_space<vmem>>, %arg5: memref<1x128xf32, #tpu.memory_space<vmem>>, %arg6: memref<256x128xf32, #tpu.memory_space<vmem>>, %arg7: memref<256x128xf32, #tpu.memory_space<vmem>>) attributes {dimension_semantics = [#tpu.dimension_semantics<parallel>, #tpu.dimension_semantics<arbitrary>], iteration_bounds = array<i64: 1, 1>, scalar_prefetch = 0 : i64, scratch_operands = 1 : i64, tpu.core_type = #tpu.core_type<tc>, window_params = [{pipeline_mode = #tpu.pipeline_mode<synchronous>, transform_indices = @transform_0, window_bounds = array<i64: 256, 128>}, {transform_indices = @transform_1, window_bounds = array<i64: 256, 256>}, {pipeline_mode = #tpu.pipeline_mode<synchronous>, transform_indices = @transform_2, window_bounds = array<i64: 128, 128>}, {pipeline_mode = #tpu.pipeline_mode<synchronous>, transform_indices = @transform_3, window_bounds = array<i64: 1, 128>}, {transform_indices = @transform_4, window_bounds = array<i64: 256, 128>}]} {
    %c0_i32 = arith.constant 0 : i32
    %0 = arith.cmpi eq, %arg1, %c0_i32 : i32
    %1 = arith.extui %0 : i1 to i32
    %c0_i32_0 = arith.constant 0 : i32
    %2 = arith.cmpi ne, %1, %c0_i32_0 : i32
    scf.if %2 {
      %cst_9 = arith.constant 0.000000e+00 : f32
      %15 = vector.broadcast %cst_9 : f32 to vector<256x128xf32>
      %c0_10 = arith.constant 0 : index
      %c0_11 = arith.constant 0 : index
      %16 = vector.load %arg7[%c0_10, %c0_11] : memref<256x128xf32, #tpu.memory_space<vmem>>, vector<256x128xf32>
      tpu.vector_store %arg7[%c0_10, %c0_11], %15 {strides = array<i32>} : memref<256x128xf32, #tpu.memory_space<vmem>>, vector<256x128xf32>,
    } else {
    }
    %c256_i32 = arith.constant 256 : i32
    %3 = arith.muli %arg1, %c256_i32 : i32
    %4 = tpu.assume_multiple %3, 256 : i32
    %5 = arith.index_cast %4 : i32 to index
    %c0 = arith.constant 0 : index
    %6 = vector.load %arg2[%5, %c0] : memref<256x128xbf16, #tpu.memory_space<vmem>>, vector<256x128xbf16>
    %c0_1 = arith.constant 0 : index
    %c0_2 = arith.constant 0 : index
    %7 = vector.load %arg7[%c0_1, %c0_2] : memref<256x128xf32, #tpu.memory_space<vmem>>, vector<256x128xf32>
    %c0_3 = arith.constant 0 : index
    %c0_4 = arith.constant 0 : index
    %8 = vector.load %arg3[%c0_3, %c0_4] : memref<256x256xbf16, #tpu.memory_space<vmem>>, vector<256x256xbf16>
    %cst = arith.constant dense<0.000000e+00> : vector<256x128xf32>
    %9 = tpu.matmul %8, %6, %cst {dimension_numbers = #tpu.dot_dimension_numbers<[1], [0], [0], [1], [0, 0, 1, 1], [], []>} : vector<256x256xbf16>, vector<256x128xbf16>, vector<256x128xf32> -> vector<256x128xf32>
    %10 = arith.addf %7, %9 : vector<256x128xf32>
    %c0_5 = arith.constant 0 : index
    %c0_6 = arith.constant 0 : index
    %11 = vector.load %arg7[%c0_5, %c0_6] : memref<256x128xf32, #tpu.memory_space<vmem>>, vector<256x128xf32>
    tpu.vector_store %arg7[%c0_5, %c0_6], %10 {strides = array<i32>} : memref<256x128xf32, #tpu.memory_space<vmem>>, vector<256x128xf32>,
    %c0_i32_7 = arith.constant 0 : i32
    %12 = arith.cmpi eq, %arg1, %c0_i32_7 : i32
    %13 = arith.extui %12 : i1 to i32
    %c0_i32_8 = arith.constant 0 : i32
    %14 = arith.cmpi ne, %13, %c0_i32_8 : i32
    scf.if %14 {
      %c0_9 = arith.constant 0 : index
      %c0_10 = arith.constant 0 : index
      %15 = vector.load %arg7[%c0_9, %c0_10] : memref<256x128xf32, #tpu.memory_space<vmem>>, vector<256x128xf32>
      %c0_11 = arith.constant 0 : index
      %c0_12 = arith.constant 0 : index
      %16 = vector.load %arg4[%c0_11, %c0_12] : memref<128x128xf32, #tpu.memory_space<vmem>>, vector<128x128xf32>
      %cst_13 = arith.constant dense<0.000000e+00> : vector<256x128xf32>
      %17 = tpu.matmul %15, %16, %cst_13 {dimension_numbers = #tpu.dot_dimension_numbers<[1], [0], [0], [1], [0, 0, 1, 1], [], []>} : vector<256x128xf32>, vector<128x128xf32>, vector<256x128xf32> -> vector<256x128xf32>
      %c0_14 = arith.constant 0 : index
      %c0_15 = arith.constant 0 : index
      %18 = vector.load %arg5[%c0_14, %c0_15] : memref<1x128xf32, #tpu.memory_space<vmem>>, vector<1x128xf32>
      %19 = vector.broadcast %18 : vector<1x128xf32> to vector<256x128xf32>
      %20 = arith.addf %17, %19 : vector<256x128xf32>
      %21 = tpu.iota {dimensions = array<i32: 1>} : vector<256x128xi32>
      %c8_i32 = arith.constant 8 : i32
      %22 = vector.broadcast %c8_i32 : i32 to vector<256x128xi32>
      %23 = arith.cmpi slt, %21, %22 : vector<256x128xi32>
      %cst_16 = arith.constant -1.000000e+30 : f32
      %24 = vector.broadcast %cst_16 : f32 to vector<256x128xf32>
      %25 = arith.select %23, %20, %24 : vector<256x128xi1>, vector<256x128xf32>
      %cst_17 = arith.constant dense<0xFF800000> : vector<256xf32>
      %26 = vector.multi_reduction <maximumf>, %25, %cst_17 [1] : vector<256x128xf32> to vector<256xf32>
      %27 = vector.shape_cast %26 : vector<256xf32> to vector<256x1xf32>
      %28 = vector.broadcast %27 : vector<256x1xf32> to vector<256x128xf32>
      %29 = arith.subf %25, %28 : vector<256x128xf32>
      %30 = math.exp %29 : vector<256x128xf32>
      %cst_18 = arith.constant dense<0.000000e+00> : vector<256xf32>
      %31 = vector.multi_reduction <add>, %30, %cst_18 [1] : vector<256x128xf32> to vector<256xf32>
      %32 = vector.shape_cast %31 : vector<256xf32> to vector<256x1xf32>
      %33 = math.log %32 : vector<256x1xf32>
      %34 = vector.broadcast %33 : vector<256x1xf32> to vector<256x128xf32>
      %35 = arith.subf %29, %34 : vector<256x128xf32>
      %c0_19 = arith.constant 0 : index
      %c0_20 = arith.constant 0 : index
      %36 = vector.load %arg6[%c0_19, %c0_20] : memref<256x128xf32, #tpu.memory_space<vmem>>, vector<256x128xf32>
      tpu.vector_store %arg6[%c0_19, %c0_20], %35 {strides = array<i32>} : memref<256x128xf32, #tpu.memory_space<vmem>>, vector<256x128xf32>,
    } else {
    }
    return
  }
  func.func @transform_0(%arg0: i32, %arg1: i32) -> (i32, i32) {
    %c0_i32 = arith.constant 0 : i32
    %c0_i32_0 = arith.constant 0 : i32
    %c0_i32_1 = arith.constant 0 : i32
    return %c0_i32, %c0_i32_0 : i32, i32
  }
  func.func @transform_1(%arg0: i32, %arg1: i32) -> (i32, i32) {
    %c0_i32 = arith.constant 0 : i32
    return %arg0, %arg1 : i32, i32
  }
  func.func @transform_2(%arg0: i32, %arg1: i32) -> (i32, i32) {
    %c0_i32 = arith.constant 0 : i32
    %c0_i32_0 = arith.constant 0 : i32
    %c0_i32_1 = arith.constant 0 : i32
    return %c0_i32, %c0_i32_0 : i32, i32
  }
  func.func @transform_3(%arg0: i32, %arg1: i32) -> (i32, i32) {
    %c0_i32 = arith.constant 0 : i32
    %c0_i32_0 = arith.constant 0 : i32
    %c0_i32_1 = arith.constant 0 : i32
    return %c0_i32, %c0_i32_0 : i32, i32
  }
  func.func @transform_4(%arg0: i32, %arg1: i32) -> (i32, i32) {
    %c0_i32 = arith.constant 0 : i32
    %c0_i32_0 = arith.constant 0 : i32
    return %arg0, %c0_i32 : i32, i32
  }
}

</mosaic_0001>

<llo_original>
// kernel: sgc_forward.3
$region0: #{sgc_forward.3}
  #allocation0 [shape = 'u32[]', space=smem, size = 0x4, offset = 0x4, fixed_abs, tag = 'smem constant byte address 0x4 - core index']
  #allocation1 [shape = 'u32[144,128]{1,0:T(1,128)}', space=vmem, size = 0x12000, scoped, tag = 'internal scratch']
  #allocation2 [shape = 'f32[256,128]{1,0:T(8,128)}', space=vmem, size = 0x20000, scoped, tag = 'scratch operand']
  %s0 = inlined_call_operand.vmem [shape: bf16[256,128], index: 0, kind: input, shape index: {}]
  %s1 = inlined_call_operand.vmem [shape: bf16[256,256], index: 1, kind: input, shape index: {}]
  %s2 = inlined_call_operand.vmem [shape: bf16[256,128], index: 2, kind: output, shape index: {}]
  %s3 = sld [smem:[#allocation0]]
  $region26: #{sgc_forward.3} parent=0
    _
  %s5 = ssub.s32 1, %s3
  %s6 = scalar_select 0, %s5, %s3
  // Predicated region
  $region2: #{sgc_forward.3} parent=0 // pred_check
    _
  $region3: #{sgc_forward.3} parent=0 // pred_check_branch
    %8 = sbr.rel (0) target = $region5
  $region4: #{sgc_forward.3} parent=0 // pred_region
    _
  $region5: #{sgc_forward.3} parent=0 // pred_fallthru
    _
  // Predicated region
  $region6: #{sgc_forward.3} parent=0 // pred_check
    _
  $region7: #{sgc_forward.3} parent=0 // pred_check_branch
    %10 = sbr.rel (0) target = $region9
  $region8: #{sgc_forward.3} parent=0 // pred_region
    _
  $region9: #{sgc_forward.3} parent=0 // pred_fallthru
    _
  %p12 = scmp.eq.s32.totalorder 0, 0
  // Predicated region
  $region10: #{sgc_forward.3} parent=0 // pred_check
    %p13 = pneg %p12
  $region11: #{sgc_forward.3} parent=0 // pred_check_branch
    %15 = sbr.rel (%p13) target = $region13
  $region12: #{sgc_forward.3} parent=0 // pred_region
    %16 = vst [vmem:[#allocation2] sm:$0xff] 0.0
    %17 = vst [vmem:[#allocation2 + $0x8] sm:$0xff] 0.0
    %18 = vst [vmem:[#allocation2 + $0x10] sm:$0xff] 0.0
    %19 = vst [vmem:[#allocation2 + $0x18] sm:$0xff] 0.0
    %20 = vst [vmem:[#allocation2 + $0x20] sm:$0xff] 0.0
    %21 = vst [vmem:[#allocation2 + $0x28] sm:$0xff] 0.0
    %22 = vst [vmem:[#allocation2 + $0x30] sm:$0xff] 0.0
    %23 = vst [vmem:[#allocation2 + $0x38] sm:$0xff] 0.0
    %24 = vst [vmem:[#allocation2 + $0x40] sm:$0xff] 0.0
    %25 = vst [vmem:[#allocation2 + $0x48] sm:$0xff] 0.0
    %26 = vst [vmem:[#allocation2 + $0x50] sm:$0xff] 0.0
    %27 = vst [vmem:[#allocation2 + $0x58] sm:$0xff] 0.0
    %28 = vst [vmem:[#allocation2 + $0x60] sm:$0xff] 0.0
    %29 = vst [vmem:[#allocation2 + $0x68] sm:$0xff] 0.0
    %30 = vst [vmem:[#allocation2 + $0x70] sm:$0xff] 0.0
    %31 = vst [vmem:[#allocation2 + $0x78] sm:$0xff] 0.0
    %32 = vst [vmem:[#allocation2 + $0x80] sm:$0xff] 0.0
    %33 = vst [vmem:[#allocation2 + $0x88] sm:$0xff] 0.0
    %34 = vst [vmem:[#allocation2 + $0x90] sm:$0xff] 0.0
    %35 = vst [vmem:[#allocation2 + $0x98] sm:$0xff] 0.0
    %36 = vst [vmem:[#allocation2 + $0xa0] sm:$0xff] 0.0
    %37 = vst [vmem:[#allocation2 + $0xa8] sm:$0xff] 0.0
    %38 = vst [vmem:[#allocation2 + $0xb0] sm:$0xff] 0.0
    %39 = vst [vmem:[#allocation2 + $0xb8] sm:$0xff] 0.0
    %40 = vst [vmem:[#allocation2 + $0xc0] sm:$0xff] 0.0
    %41 = vst [vmem:[#allocation2 + $0xc8] sm:$0xff] 0.0
    %42 = vst [vmem:[#allocation2 + $0xd0] sm:$0xff] 0.0
    %43 = vst [vmem:[#allocation2 + $0xd8] sm:$0xff] 0.0
    %44 = vst [vmem:[#allocation2 + $0xe0] sm:$0xff] 0.0
    %45 = vst [vmem:[#allocation2 + $0xe8] sm:$0xff] 0.0
    %46 = vst [vmem:[#allocation2 + $0xf0] sm:$0xff] 0.0
    %47 = vst [vmem:[#allocation2 + $0xf8] sm:$0xff] 0.0
  $region13: #{sgc_forward.3} parent=0 // pred_fallthru
    _
  %s48 = smul.u32 0, 256
  %s49 = sshra.s32 %s48, 3
  %s50 = sand.u32 %s48, 7
  %s51 = smul.addr %s49, 4
  %s52 = scalar_lea.vmem %s0, %s51
  %v53 = vld [vmem:[%s52] sm:$0xf]
  %v54 = vld [vmem:[%s52 + $0x4] sm:$0xf]
  %v55 = vld [vmem:[%s52 + $0x8] sm:$0xf]
  %v56 = vld [vmem:[%s52 + $0xc] sm:$0xf]
  %v57 = vld [vmem:[%s52 + $0x10] sm:$0xf]
  %v58 = vld [vmem:[%s52 + $0x14] sm:$0xf]
  %v59 = vld [vmem:[%s52 + $0x18] sm:$0xf]
  %v60 = vld [vmem:[%s52 + $0x1c] sm:$0xf]
  %v61 = vld [vmem:[%s52 + $0x20] sm:$0xf]
  %v62 = vld [vmem:[%s52 + $0x24] sm:$0xf]
  %v63 = vld [vmem:[%s52 + $0x28] sm:$0xf]
  %v64 = vld [vmem:[%s52 + $0x2c] sm:$0xf]
  %v65 = vld [vmem:[%s52 + $0x30] sm:$0xf]
  %v66 = vld [vmem:[%s52 + $0x34] sm:$0xf]
  %v67 = vld [vmem:[%s52 + $0x38] sm:$0xf]
  %v68 = vld [vmem:[%s52 + $0x3c] sm:$0xf]
  %v69 = vld [vmem:[%s52 + $0x40] sm:$0xf]
  %v70 = vld [vmem:[%s52 + $0x44] sm:$0xf]
  %v71 = vld [vmem:[%s52 + $0x48] sm:$0xf]
  %v72 = vld [vmem:[%s52 + $0x4c] sm:$0xf]
  %v73 = vld [vmem:[%s52 + $0x50] sm:$0xf]
  %v74 = vld [vmem:[%s52 + $0x54] sm:$0xf]
  %v75 = vld [vmem:[%s52 + $0x58] sm:$0xf]
  %v76 = vld [vmem:[%s52 + $0x5c] sm:$0xf]
  %v77 = vld [vmem:[%s52 + $0x60] sm:$0xf]
  %v78 = vld [vmem:[%s52 + $0x64] sm:$0xf]
  %v79 = vld [vmem:[%s52 + $0x68] sm:$0xf]
  %v80 = vld [vmem:[%s52 + $0x6c] sm:$0xf]
  %v81 = vld [vmem:[%s52 + $0x70] sm:$0xf]
  %v82 = vld [vmem:[%s52 + $0x74] sm:$0xf]
  %v83 = vld [vmem:[%s52 + $0x78] sm:$0xf]
  %v84 = vld [vmem:[%s52 + $0x7c] sm:$0xf]
  %v85 = vld [vmem:[#allocation2] sm:$0xff]
  %v86 = vld [vmem:[#allocation2 + $0x8] sm:$0xff]
  %v87 = vld [vmem:[#allocation2 + $0x10] sm:$0xff]
  %v88 = vld [vmem:[#allocation2 + $0x18] sm:$0xff]
  %v89 = vld [vmem:[#allocation2 + $0x20] sm:$0xff]
  %v90 = vld [vmem:[#allocation2 + $0x28] sm:$0xff]
  %v91 = vld [vmem:[#allocation2 + $0x30] sm:$0xff]
  %v92 = vld [vmem:[#allocation2 + $0x38] sm:$0xff]
  %v93 = vld [vmem:[#allocation2 + $0x40] sm:$0xff]
  %v94 = vld [vmem:[#allocation2 + $0x48] sm:$0xff]
  %v95 = vld [vmem:[#allocation2 + $0x50] sm:$0xff]
  %v96 = vld [vmem:[#allocation2 + $0x58] sm:$0xff]
  %v97 = vld [vmem:[#allocation2 + $0x60] sm:$0xff]
  %v98 = vld [vmem:[#allocation2 + $0x68] sm:$0xff]
  %v99 = vld [vmem:[#allocation2 + $0x70] sm:$0xff]
  %v100 = vld [vmem:[#allocation2 + $0x78] sm:$0xff]
  %v101 = vld [vmem:[#allocation2 + $0x80] sm:$0xff]
  %v102 = vld [vmem:[#allocation2 + $0x88] sm:$0xff]
  %v103 = vld [vmem:[#allocation2 + $0x90] sm:$0xff]
  %v104 = vld [vmem:[#allocation2 + $0x98] sm:$0xff]
  %v105 = vld [vmem:[#allocation2 + $0xa0] sm:$0xff]
  %v106 = vld [vmem:[#allocation2 + $0xa8] sm:$0xff]
  %v107 = vld [vmem:[#allocation2 + $0xb0] sm:$0xff]
  %v108 = vld [vmem:[#allocation2 + $0xb8] sm:$0xff]
  %v109 = vld [vmem:[#allocation2 + $0xc0] sm:$0xff]
  %v110 = vld [vmem:[#allocation2 + $0xc8] sm:$0xff]
  %v111 = vld [vmem:[#allocation2 + $0xd0] sm:$0xff]
  %v112 = vld [vmem:[#allocation2 + $0xd8] sm:$0xff]
  %v113 = vld [vmem:[#allocation2 + $0xe0] sm:$0xff]
  %v114 = vld [vmem:[#allocation2 + $0xe8] sm:$0xff]
  %v115 = vld [vmem:[#allocation2 + $0xf0] sm:$0xff]
  %v116 = vld [vmem:[#allocation2 + $0xf8] sm:$0xff]
  %v117 = vld [vmem:[%s1] sm:$0xff]
  %v118 = vld [vmem:[%s1 + $0x8] sm:$0xff]
  %v119 = vld [vmem:[%s1 + $0x10] sm:$0xff]
  %v120 = vld [vmem:[%s1 + $0x18] sm:$0xff]
  %v121 = vld [vmem:[%s1 + $0x20] sm:$0xff]
  %v122 = vld [vmem:[%s1 + $0x28] sm:$0xff]
  %v123 = vld [vmem:[%s1 + $0x30] sm:$0xff]
  %v124 = vld [vmem:[%s1 + $0x38] sm:$0xff]
  %v125 = vld [vmem:[%s1 + $0x40] sm:$0xff]
  %v126 = vld [vmem:[%s1 + $0x48] sm:$0xff]
  %v127 = vld [vmem:[%s1 + $0x50] sm:$0xff]
  %v128 = vld [vmem:[%s1 + $0x58] sm:$0xff]
  %v129 = vld [vmem:[%s1 + $0x60] sm:$0xff]
  %v130 = vld [vmem:[%s1 + $0x68] sm:$0xff]
  %v131 = vld [vmem:[%s1 + $0x70] sm:$0xff]
  %v132 = vld [vmem:[%s1 + $0x78] sm:$0xff]
  %v133 = vld [vmem:[%s1 + $0x80] sm:$0xff]
  %v134 = vld [vmem:[%s1 + $0x88] sm:$0xff]
  %v135 = vld [vmem:[%s1 + $0x90] sm:$0xff]
  %v136 = vld [vmem:[%s1 + $0x98] sm:$0xff]
  %v137 = vld [vmem:[%s1 + $0xa0] sm:$0xff]
  %v138 = vld [vmem:[%s1 + $0xa8] sm:$0xff]
  %v139 = vld [vmem:[%s1 + $0xb0] sm:$0xff]
  %v140 = vld [vmem:[%s1 + $0xb8] sm:$0xff]
  %v141 = vld [vmem:[%s1 + $0xc0] sm:$0xff]
  %v142 = vld [vmem:[%s1 + $0xc8] sm:$0xff]
  %v143 = vld [vmem:[%s1 + $0xd0] sm:$0xff]
  %v144 = vld [vmem:[%s1 + $0xd8] sm:$0xff]
  %v145 = vld [vmem:[%s1 + $0xe0] sm:$0xff]
  %v146 = vld [vmem:[%s1 + $0xe8] sm:$0xff]
  %v147 = vld [vmem:[%s1 + $0xf0] sm:$0xff]
  %v148 = vld [vmem:[%s1 + $0xf8] sm:$0xff]
  %v181 = vunpack.c.l.b16 %v117
  %v182 = vunpack.c.h.b16 %v117
  %v183 = vunpack.c.l.b16 %v118
  %v184 = vunpack.c.h.b16 %v118
  %v185 = vunpack.c.l.b16 %v119
  %v186 = vunpack.c.h.b16 %v119
  %v187 = vunpack.c.l.b16 %v120
  %v188 = vunpack.c.h.b16 %v120
  %v189 = vunpack.c.l.b16 %v121
  %v190 = vunpack.c.h.b16 %v121
  %v191 = vunpack.c.l.b16 %v122
  %v192 = vunpack.c.h.b16 %v122
  %v193 = vunpack.c.l.b16 %v123
  %v194 = vunpack.c.h.b16 %v123
  %v195 = vunpack.c.l.b16 %v124
  %v196 = vunpack.c.h.b16 %v124
  %v197 = vunpack.c.l.b16 %v125
  %v198 = vunpack.c.h.b16 %v125
  %v199 = vunpack.c.l.b16 %v126
  %v200 = vunpack.c.h.b16 %v126
  %v201 = vunpack.c.l.b16 %v127
  %v202 = vunpack.c.h.b16 %v127
  %v203 = vunpack.c.l.b16 %v128
  %v204 = vunpack.c.h.b16 %v128
  %v205 = vunpack.c.l.b16 %v129
  %v206 = vunpack.c.h.b16 %v129
  %v207 = vunpack.c.l.b16 %v130
  %v208 = vunpack.c.h.b16 %v130
  %v209 = vunpack.c.l.b16 %v131
  %v210 = vunpack.c.h.b16 %v131
  %v211 = vunpack.c.l.b16 %v132
  %v212 = vunpack.c.h.b16 %v132
  %v213 = vunpack.c.l.b16 %v133
  %v214 = vunpack.c.h.b16 %v133
  %v215 = vunpack.c.l.b16 %v134
  %v216 = vunpack.c.h.b16 %v134
  %v217 = vunpack.c.l.b16 %v135
  %v218 = vunpack.c.h.b16 %v135
  %v219 = vunpack.c.l.b16 %v136
  %v220 = vunpack.c.h.b16 %v136
  %v221 = vunpack.c.l.b16 %v137
  %v222 = vunpack.c.h.b16 %v137
  %v223 = vunpack.c.l.b16 %v138
  %v224 = vunpack.c.h.b16 %v138
  %v225 = vunpack.c.l.b16 %v139
  %v226 = vunpack.c.h.b16 %v139
  %v227 = vunpack.c.l.b16 %v140
  %v228 = vunpack.c.h.b16 %v140
  %v229 = vunpack.c.l.b16 %v141
  %v230 = vunpack.c.h.b16 %v141
  %v231 = vunpack.c.l.b16 %v142
  %v232 = vunpack.c.h.b16 %v142
  %v233 = vunpack.c.l.b16 %v143
  %v234 = vunpack.c.h.b16 %v143
  %v235 = vunpack.c.l.b16 %v144
  %v236 = vunpack.c.h.b16 %v144
  %v237 = vunpack.c.l.b16 %v145
  %v238 = vunpack.c.h.b16 %v145
  %v239 = vunpack.c.l.b16 %v146
  %v240 = vunpack.c.h.b16 %v146
  %v241 = vunpack.c.l.b16 %v147
  %v242 = vunpack.c.h.b16 %v147
  %v243 = vunpack.c.l.b16 %v148
  %v244 = vunpack.c.h.b16 %v148
  %v245 = vpack.c.b16 %v183, %v181
  %v246 = vpack.c.b16 %v184, %v182
  %v247 = vpack.c.b16 %v187, %v185
  %v248 = vpack.c.b16 %v188, %v186
  %v249 = vpack.c.b16 %v191, %v189
  %v250 = vpack.c.b16 %v192, %v190
  %v251 = vpack.c.b16 %v195, %v193
  %v252 = vpack.c.b16 %v196, %v194
  %v253 = vpack.c.b16 %v199, %v197
  %v254 = vpack.c.b16 %v200, %v198
  %v255 = vpack.c.b16 %v203, %v201
  %v256 = vpack.c.b16 %v204, %v202
  %v257 = vpack.c.b16 %v207, %v205
  %v258 = vpack.c.b16 %v208, %v206
  %v259 = vpack.c.b16 %v211, %v209
  %v260 = vpack.c.b16 %v212, %v210
  %v261 = vpack.c.b16 %v215, %v213
  %v262 = vpack.c.b16 %v216, %v214
  %v263 = vpack.c.b16 %v219, %v217
  %v264 = vpack.c.b16 %v220, %v218
  %v265 = vpack.c.b16 %v223, %v221
  %v266 = vpack.c.b16 %v224, %v222
  %v267 = vpack.c.b16 %v227, %v225
  %v268 = vpack.c.b16 %v228, %v226
  %v269 = vpack.c.b16 %v231, %v229
  %v270 = vpack.c.b16 %v232, %v230
  %v271 = vpack.c.b16 %v235, %v233
  %v272 = vpack.c.b16 %v236, %v234
  %v273 = vpack.c.b16 %v239, %v237
  %v274 = vpack.c.b16 %v240, %v238
  %v275 = vpack.c.b16 %v243, %v241
  %v276 = vpack.c.b16 %v244, %v242
  %v341 = vunpack.c.l.b16 %v53
  %v342 = vunpack.c.l.b16 %v54
  %v343 = vunpack.c.l.b16 %v55
  %v344 = vunpack.c.l.b16 %v56
  %v345 = vunpack.c.l.b16 %v57
  %v346 = vunpack.c.l.b16 %v58
  %v347 = vunpack.c.l.b16 %v59
  %v348 = vunpack.c.l.b16 %v60
  %v349 = vunpack.c.l.b16 %v61
  %v350 = vunpack.c.l.b16 %v62
  %v351 = vunpack.c.l.b16 %v63
  %v352 = vunpack.c.l.b16 %v64
  %v353 = vunpack.c.l.b16 %v65
  %v354 = vunpack.c.l.b16 %v66
  %v355 = vunpack.c.l.b16 %v67
  %v356 = vunpack.c.l.b16 %v68
  %v357 = vunpack.c.l.b16 %v69
  %v358 = vunpack.c.l.b16 %v70
  %v359 = vunpack.c.l.b16 %v71
  %v360 = vunpack.c.l.b16 %v72
  %v361 = vunpack.c.l.b16 %v73
  %v362 = vunpack.c.l.b16 %v74
  %v363 = vunpack.c.l.b16 %v75
  %v364 = vunpack.c.l.b16 %v76
  %v365 = vunpack.c.l.b16 %v77
  %v366 = vunpack.c.l.b16 %v78
  %v367 = vunpack.c.l.b16 %v79
  %v368 = vunpack.c.l.b16 %v80
  %v369 = vunpack.c.l.b16 %v81
  %v370 = vunpack.c.l.b16 %v82
  %v371 = vunpack.c.l.b16 %v83
  %v372 = vunpack.c.l.b16 %v84
  %v373 = vpack.c.b16 %v342, %v341
  %v374 = vpack.c.b16 %v344, %v343
  %v375 = vpack.c.b16 %v346, %v345
  %v376 = vpack.c.b16 %v348, %v347
  %v377 = vpack.c.b16 %v350, %v349
  %v378 = vpack.c.b16 %v352, %v351
  %v379 = vpack.c.b16 %v354, %v353
  %v380 = vpack.c.b16 %v356, %v355
  %v381 = vpack.c.b16 %v358, %v357
  %v382 = vpack.c.b16 %v360, %v359
  %v383 = vpack.c.b16 %v362, %v361
  %v384 = vpack.c.b16 %v364, %v363
  %v385 = vpack.c.b16 %v366, %v365
  %v386 = vpack.c.b16 %v368, %v367
  %v387 = vpack.c.b16 %v370, %v369
  %v388 = vpack.c.b16 %v372, %v371
  %405 = vmatprep.subr.bf16.mxu0 0
  %406 = vmatpush1.bf16.msra.mxu0 %v373
  %407 = vmatprep.subr.bf16.mxu0 0
  %408 = vmatpush1.bf16.msra.mxu0 %v374
  %409 = vmatprep.subr.bf16.mxu0 0
  %410 = vmatpush1.bf16.msra.mxu0 %v375
  %411 = vmatprep.subr.bf16.mxu0 0
  %412 = vmatpush1.bf16.msra.mxu0 %v376
  %413 = vmatprep.subr.bf16.mxu0 0
  %414 = vmatpush1.bf16.msra.mxu0 %v377
  %415 = vmatprep.subr.bf16.mxu0 0
  %416 = vmatpush1.bf16.msra.mxu0 %v378
  %417 = vmatprep.subr.bf16.mxu0 0
  %418 = vmatpush1.bf16.msra.mxu0 %v379
  %419 = vmatprep.subr.bf16.mxu0 0
  %420 = vmatpush1.bf16.msra.mxu0 %v380
  %421 = vmatprep.subr.bf16.mxu0 0
  %422 = vmatpush1.bf16.msra.mxu0 %v381
  %423 = vmatprep.subr.bf16.mxu0 0
  %424 = vmatpush1.bf16.msra.mxu0 %v382
  %425 = vmatprep.subr.bf16.mxu0 0
  %426 = vmatpush1.bf16.msra.mxu0 %v383
  %427 = vmatprep.subr.bf16.mxu0 0
  %428 = vmatpush1.bf16.msra.mxu0 %v384
  %429 = vmatprep.subr.bf16.mxu0 0
  %430 = vmatpush1.bf16.msra.mxu0 %v385
  %431 = vmatprep.subr.bf16.mxu0 0
  %432 = vmatpush1.bf16.msra.mxu0 %v386
  %433 = vmatprep.subr.bf16.mxu0 0
  %434 = vmatpush1.bf16.msra.mxu0 %v387
  %435 = vmatprep.subr.bf16.mxu0 0
  %436 = vmatpush1.bf16.msra.mxu0 %v388
  %437 = vmatprep.mubr.bf16.mxu0 %v246
  %438 = vmatmul.mubr.bf16.gmra.mrb[0].mxu0 %v245
  %v439 = vpop.f32.mrb[0].mxu0
  %v440 = vadd.f32 0.0, %v439
  %v441 = vpop.f32.mrb[0].mxu0
  %v442 = vpop.f32.mrb[0].mxu0
  %v443 = vadd.f32 0.0, %v442
  %v444 = vpop.f32.mrb[0].mxu0
  %445 = vmatprep.mubr.bf16.mxu0 %v248
  %446 = vmatmul.mubr.bf16.gmra.mrb[0].mxu0 %v247
  %v447 = vpop.f32.mrb[0].mxu0
  %v448 = vadd.f32 0.0, %v447
  %v449 = vpop.f32.mrb[0].mxu0
  %v450 = vpop.f32.mrb[0].mxu0
  %v451 = vadd.f32 0.0, %v450
  %v452 = vpop.f32.mrb[0].mxu0
  %453 = vmatprep.mubr.bf16.mxu0 %v250
  %454 = vmatmul.mubr.bf16.gmra.mrb[0].mxu0 %v249
  %v455 = vpop.f32.mrb[0].mxu0
  %v456 = vadd.f32 0.0, %v455
  %v457 = vpop.f32.mrb[0].mxu0
  %v458 = vpop.f32.mrb[0].mxu0
  %v459 = vadd.f32 0.0, %v458
  %v460 = vpop.f32.mrb[0].mxu0
  %461 = vmatprep.mubr.bf16.mxu0 %v252
  %462 = vmatmul.mubr.bf16.gmra.mrb[0].mxu0 %v251
  %v463 = vpop.f32.mrb[0].mxu0
  %v464 = vadd.f32 0.0, %v463
  %v465 = vpop.f32.mrb[0].mxu0
  %v466 = vpop.f32.mrb[0].mxu0
  %v467 = vadd.f32 0.0, %v466
  %v468 = vpop.f32.mrb[0].mxu0
  %469 = vmatprep.mubr.bf16.mxu0 %v254
  %470 = vmatmul.mubr.bf16.gmra.mrb[0].mxu0 %v253
  %v471 = vpop.f32.mrb[0].mxu0
  %v472 = vadd.f32 0.0, %v471
  %v473 = vpop.f32.mrb[0].mxu0
  %v474 = vpop.f32.mrb[0].mxu0
  %v475 = vadd.f32 0.0, %v474
  %v476 = vpop.f32.mrb[0].mxu0
  %477 = vmatprep.mubr.bf16.mxu0 %v256
  %478 = vmatmul.mubr.bf16.gmra.mrb[0].mxu0 %v255
  %v479 = vpop.f32.mrb[0].mxu0
  %v480 = vadd.f32 0.0, %v479
  %v481 = vpop.f32.mrb[0].mxu0
  %v482 = vpop.f32.mrb[0].mxu0
  %v483 = vadd.f32 0.0, %v482
  %v484 = vpop.f32.mrb[0].mxu0
  %485 = vmatprep.mubr.bf16.mxu0 %v258
  %486 = vmatmul.mubr.bf16.gmra.mrb[0].mxu0 %v257
  %v487 = vpop.f32.mrb[0].mxu0
  %v488 = vadd.f32 0.0, %v487
  %v489 = vpop.f32.mrb[0].mxu0
  %v490 = vpop.f32.mrb[0].mxu0
  %v491 = vadd.f32 0.0, %v490
  %v492 = vpop.f32.mrb[0].mxu0
  %493 = vmatprep.mubr.bf16.mxu0 %v260
  %494 = vmatmul.mubr.bf16.gmra.mrb[0].mxu0 %v259
  %v495 = vpop.f32.mrb[0].mxu0
  %v496 = vadd.f32 0.0, %v495
  %v497 = vpop.f32.mrb[0].mxu0
  %v498 = vpop.f32.mrb[0].mxu0
  %v499 = vadd.f32 0.0, %v498
  %v500 = vpop.f32.mrb[0].mxu0
  %501 = vmatprep.mubr.bf16.mxu0 %v262
  %502 = vmatmul.mubr.bf16.gmra.mrb[0].mxu0 %v261
  %v503 = vpop.f32.mrb[0].mxu0
  %v504 = vadd.f32 0.0, %v503
  %v505 = vpop.f32.mrb[0].mxu0
  %v506 = vpop.f32.mrb[0].mxu0
  %v507 = vadd.f32 0.0, %v506
  %v508 = vpop.f32.mrb[0].mxu0
  %509 = vmatprep.mubr.bf16.mxu0 %v264
  %510 = vmatmul.mubr.bf16.gmra.mrb[0].mxu0 %v263
  %v511 = vpop.f32.mrb[0].mxu0
  %v512 = vadd.f32 0.0, %v511
  %v513 = vpop.f32.mrb[0].mxu0
  %v514 = vpop.f32.mrb[0].mxu0
  %v515 = vadd.f32 0.0, %v514
  %v516 = vpop.f32.mrb[0].mxu0
  %517 = vmatprep.mubr.bf16.mxu0 %v266
  %518 = vmatmul.mubr.bf16.gmra.mrb[0].mxu0 %v265
  %v519 = vpop.f32.mrb[0].mxu0
  %v520 = vadd.f32 0.0, %v519
  %v521 = vpop.f32.mrb[0].mxu0
  %v522 = vpop.f32.mrb[0].mxu0
  %v523 = vadd.f32 0.0, %v522
  %v524 = vpop.f32.mrb[0].mxu0
  %525 = vmatprep.mubr.bf16.mxu0 %v268
  %526 = vmatmul.mubr.bf16.gmra.mrb[0].mxu0 %v267
  %v527 = vpop.f32.mrb[0].mxu0
  %v528 = vadd.f32 0.0, %v527
  %v529 = vpop.f32.mrb[0].mxu0
  %v530 = vpop.f32.mrb[0].mxu0
  %v531 = vadd.f32 0.0, %v530
  %v532 = vpop.f32.mrb[0].mxu0
  %533 = vmatprep.mubr.bf16.mxu0 %v270
  %534 = vmatmul.mubr.bf16.gmra.mrb[0].mxu0 %v269
  %v535 = vpop.f32.mrb[0].mxu0
  %v536 = vadd.f32 0.0, %v535
  %v537 = vpop.f32.mrb[0].mxu0
  %v538 = vpop.f32.mrb[0].mxu0
  %v539 = vadd.f32 0.0, %v538
  %v540 = vpop.f32.mrb[0].mxu0
  %541 = vmatprep.mubr.bf16.mxu0 %v272
  %542 = vmatmul.mubr.bf16.gmra.mrb[0].mxu0 %v271
  %v543 = vpop.f32.mrb[0].mxu0
  %v544 = vadd.f32 0.0, %v543
  %v545 = vpop.f32.mrb[0].mxu0
  %v546 = vpop.f32.mrb[0].mxu0
  %v547 = vadd.f32 0.0, %v546
  %v548 = vpop.f32.mrb[0].mxu0
  %549 = vmatprep.mubr.bf16.mxu0 %v274
  %550 = vmatmul.mubr.bf16.gmra.mrb[0].mxu0 %v273
  %v551 = vpop.f32.mrb[0].mxu0
  %v552 = vadd.f32 0.0, %v551
  %v553 = vpop.f32.mrb[0].mxu0
  %v554 = vpop.f32.mrb[0].mxu0
  %v555 = vadd.f32 0.0, %v554
  %v556 = vpop.f32.mrb[0].mxu0
  %557 = vmatprep.mubr.bf16.mxu0 %v276
  %558 = vmatmul.mubr.bf16.gmra.mrb[0].mxu0 %v275
  %v559 = vpop.f32.mrb[0].mxu0
  %v560 = vadd.f32 0.0, %v559
  %v561 = vpop.f32.mrb[0].mxu0
  %v562 = vpop.f32.mrb[0].mxu0
  %v563 = vadd.f32 0.0, %v562
  %v564 = vpop.f32.mrb[0].mxu0
  %565 = vdwg.mxu0
  %v566 = vadd.f32 %v85, %v440
  %v567 = vadd.f32 %v86, %v443
  %v568 = vadd.f32 %v87, %v448
  %v569 = vadd.f32 %v88, %v451
  %v570 = vadd.f32 %v89, %v456
  %v571 = vadd.f32 %v90, %v459
  %v572 = vadd.f32 %v91, %v464
  %v573 = vadd.f32 %v92, %v467
  %v574 = vadd.f32 %v93, %v472
  %v575 = vadd.f32 %v94, %v475
  %v576 = vadd.f32 %v95, %v480
  %v577 = vadd.f32 %v96, %v483
  %v578 = vadd.f32 %v97, %v488
  %v579 = vadd.f32 %v98, %v491
  %v580 = vadd.f32 %v99, %v496
  %v581 = vadd.f32 %v100, %v499
  %v582 = vadd.f32 %v101, %v504
  %v583 = vadd.f32 %v102, %v507
  %v584 = vadd.f32 %v103, %v512
  %v585 = vadd.f32 %v104, %v515
  %v586 = vadd.f32 %v105, %v520
  %v587 = vadd.f32 %v106, %v523
  %v588 = vadd.f32 %v107, %v528
  %v589 = vadd.f32 %v108, %v531
  %v590 = vadd.f32 %v109, %v536
  %v591 = vadd.f32 %v110, %v539
  %v592 = vadd.f32 %v111, %v544
  %v593 = vadd.f32 %v112, %v547
  %v594 = vadd.f32 %v113, %v552
  %v595 = vadd.f32 %v114, %v555
  %v596 = vadd.f32 %v115, %v560
  %v597 = vadd.f32 %v116, %v563
  %598 = vst [vmem:[#allocation2] sm:$0xff] %v566
  %599 = vst [vmem:[#allocation2 + $0x8] sm:$0xff] %v567
  %600 = vst [vmem:[#allocation2 + $0x10] sm:$0xff] %v568
  %601 = vst [vmem:[#allocation2 + $0x18] sm:$0xff] %v569
  %602 = vst [vmem:[#allocation2 + $0x20] sm:$0xff] %v570
  %603 = vst [vmem:[#allocation2 + $0x28] sm:$0xff] %v571
  %604 = vst [vmem:[#allocation2 + $0x30] sm:$0xff] %v572
  %605 = vst [vmem:[#allocation2 + $0x38] sm:$0xff] %v573
  %606 = vst [vmem:[#allocation2 + $0x40] sm:$0xff] %v574
  %607 = vst [vmem:[#allocation2 + $0x48] sm:$0xff] %v575
  %608 = vst [vmem:[#allocation2 + $0x50] sm:$0xff] %v576
  %609 = vst [vmem:[#allocation2 + $0x58] sm:$0xff] %v577
  %610 = vst [vmem:[#allocation2 + $0x60] sm:$0xff] %v578
  %611 = vst [vmem:[#allocation2 + $0x68] sm:$0xff] %v579
  %612 = vst [vmem:[#allocation2 + $0x70] sm:$0xff] %v580
  %613 = vst [vmem:[#allocation2 + $0x78] sm:$0xff] %v581
  %614 = vst [vmem:[#allocation2 + $0x80] sm:$0xff] %v582
  %615 = vst [vmem:[#allocation2 + $0x88] sm:$0xff] %v583
  %616 = vst [vmem:[#allocation2 + $0x90] sm:$0xff] %v584
  %617 = vst [vmem:[#allocation2 + $0x98] sm:$0xff] %v585
  %618 = vst [vmem:[#allocation2 + $0xa0] sm:$0xff] %v586
  %619 = vst [vmem:[#allocation2 + $0xa8] sm:$0xff] %v587
  %620 = vst [vmem:[#allocation2 + $0xb0] sm:$0xff] %v588
  %621 = vst [vmem:[#allocation2 + $0xb8] sm:$0xff] %v589
  %622 = vst [vmem:[#allocation2 + $0xc0] sm:$0xff] %v590
  %623 = vst [vmem:[#allocation2 + $0xc8] sm:$0xff] %v591
  %624 = vst [vmem:[#allocation2 + $0xd0] sm:$0xff] %v592
  %625 = vst [vmem:[#allocation2 + $0xd8] sm:$0xff] %v593
  %626 = vst [vmem:[#allocation2 + $0xe0] sm:$0xff] %v594
  %627 = vst [vmem:[#allocation2 + $0xe8] sm:$0xff] %v595
  %628 = vst [vmem:[#allocation2 + $0xf0] sm:$0xff] %v596
  %629 = vst [vmem:[#allocation2 + $0xf8] sm:$0xff] %v597
  // Predicated region
  $region14: #{sgc_forward.3} parent=0 // pred_check
    %p630 = pneg %p12
  $region15: #{sgc_forward.3} parent=0 // pred_check_branch
    %632 = sbr.rel (%p630) target = $region17
  $region16: #{sgc_forward.3} parent=0 // pred_region
    %v633 = vld [vmem:[#allocation2] sm:$0xff]
    %v634 = vld [vmem:[#allocation2 + $0x8] sm:$0xff]
    %v635 = vld [vmem:[#allocation2 + $0x10] sm:$0xff]
    %v636 = vld [vmem:[#allocation2 + $0x18] sm:$0xff]
    %v637 = vld [vmem:[#allocation2 + $0x20] sm:$0xff]
    %v638 = vld [vmem:[#allocation2 + $0x28] sm:$0xff]
    %v639 = vld [vmem:[#allocation2 + $0x30] sm:$0xff]
    %v640 = vld [vmem:[#allocation2 + $0x38] sm:$0xff]
    %v641 = vld [vmem:[#allocation2 + $0x40] sm:$0xff]
    %v642 = vld [vmem:[#allocation2 + $0x48] sm:$0xff]
    %v643 = vld [vmem:[#allocation2 + $0x50] sm:$0xff]
    %v644 = vld [vmem:[#allocation2 + $0x58] sm:$0xff]
    %v645 = vld [vmem:[#allocation2 + $0x60] sm:$0xff]
    %v646 = vld [vmem:[#allocation2 + $0x68] sm:$0xff]
    %v647 = vld [vmem:[#allocation2 + $0x70] sm:$0xff]
    %v648 = vld [vmem:[#allocation2 + $0x78] sm:$0xff]
    %v649 = vld [vmem:[#allocation2 + $0x80] sm:$0xff]
    %v650 = vld [vmem:[#allocation2 + $0x88] sm:$0xff]
    %v651 = vld [vmem:[#allocation2 + $0x90] sm:$0xff]
    %v652 = vld [vmem:[#allocation2 + $0x98] sm:$0xff]
    %v653 = vld [vmem:[#allocation2 + $0xa0] sm:$0xff]
    %v654 = vld [vmem:[#allocation2 + $0xa8] sm:$0xff]
    %v655 = vld [vmem:[#allocation2 + $0xb0] sm:$0xff]
    %v656 = vld [vmem:[#allocation2 + $0xb8] sm:$0xff]
    %v657 = vld [vmem:[#allocation2 + $0xc0] sm:$0xff]
    %v658 = vld [vmem:[#allocation2 + $0xc8] sm:$0xff]
    %v659 = vld [vmem:[#allocation2 + $0xd0] sm:$0xff]
    %v660 = vld [vmem:[#allocation2 + $0xd8] sm:$0xff]
    %v661 = vld [vmem:[#allocation2 + $0xe0] sm:$0xff]
    %v662 = vld [vmem:[#allocation2 + $0xe8] sm:$0xff]
    %v663 = vld [vmem:[#allocation2 + $0xf0] sm:$0xff]
    %v664 = vld [vmem:[#allocation2 + $0xf8] sm:$0xff]
    %v665 = vpack.c.bf16 %v634, %v633
    %v666 = vpack.c.bf16 %v636, %v635
    %v667 = vpack.c.bf16 %v638, %v637
    %v668 = vpack.c.bf16 %v640, %v639
    %v669 = vpack.c.bf16 %v642, %v641
    %v670 = vpack.c.bf16 %v644, %v643
    %v671 = vpack.c.bf16 %v646, %v645
    %v672 = vpack.c.bf16 %v648, %v647
    %v673 = vpack.c.bf16 %v650, %v649
    %v674 = vpack.c.bf16 %v652, %v651
    %v675 = vpack.c.bf16 %v654, %v653
    %v676 = vpack.c.bf16 %v656, %v655
    %v677 = vpack.c.bf16 %v658, %v657
    %v678 = vpack.c.bf16 %v660, %v659
    %v679 = vpack.c.bf16 %v662, %v661
    %v680 = vpack.c.bf16 %v664, %v663
    %v697 = vunpack.c.l.b16 %v665
    %v698 = vunpack.c.h.b16 %v665
    %v699 = vunpack.c.l.b16 %v666
    %v700 = vunpack.c.h.b16 %v666
    %v701 = vunpack.c.l.b16 %v667
    %v702 = vunpack.c.h.b16 %v667
    %v703 = vunpack.c.l.b16 %v668
    %v704 = vunpack.c.h.b16 %v668
    %v705 = vunpack.c.l.b16 %v669
    %v706 = vunpack.c.h.b16 %v669
    %v707 = vunpack.c.l.b16 %v670
    %v708 = vunpack.c.h.b16 %v670
    %v709 = vunpack.c.l.b16 %v671
    %v710 = vunpack.c.h.b16 %v671
    %v711 = vunpack.c.l.b16 %v672
    %v712 = vunpack.c.h.b16 %v672
    %v713 = vunpack.c.l.b16 %v673
    %v714 = vunpack.c.h.b16 %v673
    %v715 = vunpack.c.l.b16 %v674
    %v716 = vunpack.c.h.b16 %v674
    %v717 = vunpack.c.l.b16 %v675
    %v718 = vunpack.c.h.b16 %v675
    %v719 = vunpack.c.l.b16 %v676
    %v720 = vunpack.c.h.b16 %v676
    %v721 = vunpack.c.l.b16 %v677
    %v722 = vunpack.c.h.b16 %v677
    %v723 = vunpack.c.l.b16 %v678
    %v724 = vunpack.c.h.b16 %v678
    %v725 = vunpack.c.l.b16 %v679
    %v726 = vunpack.c.h.b16 %v679
    %v727 = vunpack.c.l.b16 %v680
    %v728 = vunpack.c.h.b16 %v680
    %v729 = vpack.c.b16 %v697, %v697
    %v730 = vpack.c.b16 %v698, %v698
    %v731 = vpack.c.b16 %v699, %v699
    %v732 = vpack.c.b16 %v700, %v700
    %v733 = vpack.c.b16 %v701, %v701
    %v734 = vpack.c.b16 %v702, %v702
    %v735 = vpack.c.b16 %v703, %v703
    %v736 = vpack.c.b16 %v704, %v704
    %v737 = vpack.c.b16 %v705, %v705
    %v738 = vpack.c.b16 %v706, %v706
    %v739 = vpack.c.b16 %v707, %v707
    %v740 = vpack.c.b16 %v708, %v708
    %v741 = vpack.c.b16 %v709, %v709
    %v742 = vpack.c.b16 %v710, %v710
    %v743 = vpack.c.b16 %v711, %v711
    %v744 = vpack.c.b16 %v712, %v712
    %v745 = vpack.c.b16 %v713, %v713
    %v746 = vpack.c.b16 %v714, %v714
    %v747 = vpack.c.b16 %v715, %v715
    %v748 = vpack.c.b16 %v716, %v716
    %v749 = vpack.c.b16 %v717, %v717
    %v750 = vpack.c.b16 %v718, %v718
    %v751 = vpack.c.b16 %v719, %v719
    %v752 = vpack.c.b16 %v720, %v720
    %v753 = vpack.c.b16 %v721, %v721
    %v754 = vpack.c.b16 %v722, %v722
    %v755 = vpack.c.b16 %v723, %v723
    %v756 = vpack.c.b16 %v724, %v724
    %v757 = vpack.c.b16 %v725, %v725
    %v758 = vpack.c.b16 %v726, %v726
    %v759 = vpack.c.b16 %v727, %v727
    %v760 = vpack.c.b16 %v728, %v728
    %793 = vst [vmem:[%s2] sm:$0xf] %v729
    %794 = vst [vmem:[%s2 + $0x4] sm:$0xf] %v730
    %795 = vst [vmem:[%s2 + $0x8] sm:$0xf] %v731
    %796 = vst [vmem:[%s2 + $0xc] sm:$0xf] %v732
    %797 = vst [vmem:[%s2 + $0x10] sm:$0xf] %v733
    %798 = vst [vmem:[%s2 + $0x14] sm:$0xf] %v734
    %799 = vst [vmem:[%s2 + $0x18] sm:$0xf] %v735
    %800 = vst [vmem:[%s2 + $0x1c] sm:$0xf] %v736
    %801 = vst [vmem:[%s2 + $0x20] sm:$0xf] %v737
    %802 = vst [vmem:[%s2 + $0x24] sm:$0xf] %v738
    %803 = vst [vmem:[%s2 + $0x28] sm:$0xf] %v739
    %804 = vst [vmem:[%s2 + $0x2c] sm:$0xf] %v740
    %805 = vst [vmem:[%s2 + $0x30] sm:$0xf] %v741
    %806 = vst [vmem:[%s2 + $0x34] sm:$0xf] %v742
    %807 = vst [vmem:[%s2 + $0x38] sm:$0xf] %v743
    %808 = vst [vmem:[%s2 + $0x3c] sm:$0xf] %v744
    %809 = vst [vmem:[%s2 + $0x40] sm:$0xf] %v745
    %810 = vst [vmem:[%s2 + $0x44] sm:$0xf] %v746
    %811 = vst [vmem:[%s2 + $0x48] sm:$0xf] %v747
    %812 = vst [vmem:[%s2 + $0x4c] sm:$0xf] %v748
    %813 = vst [vmem:[%s2 + $0x50] sm:$0xf] %v749
    %814 = vst [vmem:[%s2 + $0x54] sm:$0xf] %v750
    %815 = vst [vmem:[%s2 + $0x58] sm:$0xf] %v751
    %816 = vst [vmem:[%s2 + $0x5c] sm:$0xf] %v752
    %817 = vst [vmem:[%s2 + $0x60] sm:$0xf] %v753
    %818 = vst [vmem:[%s2 + $0x64] sm:$0xf] %v754
    %819 = vst [vmem:[%s2 + $0x68] sm:$0xf] %v755
    %820 = vst [vmem:[%s2 + $0x6c] sm:$0xf] %v756
    %821 = vst [vmem:[%s2 + $0x70] sm:$0xf] %v757
    %822 = vst [vmem:[%s2 + $0x74] sm:$0xf] %v758
    %823 = vst [vmem:[%s2 + $0x78] sm:$0xf] %v759
    %824 = vst [vmem:[%s2 + $0x7c] sm:$0xf] %v760
  $region17: #{sgc_forward.3} parent=0 // pred_fallthru
    _
  // Predicated region
  $region18: #{sgc_forward.3} parent=0 // pred_check
    _
  $region19: #{sgc_forward.3} parent=0 // pred_check_branch
    %826 = sbr.rel (0) target = $region21
  $region20: #{sgc_forward.3} parent=0 // pred_region
    _
  $region21: #{sgc_forward.3} parent=0 // pred_fallthru
    _
  // Predicated region
  $region22: #{sgc_forward.3} parent=0 // pred_check
    _
  $region23: #{sgc_forward.3} parent=0 // pred_check_branch
    %828 = sbr.rel (0) target = $region25
  $region24: #{sgc_forward.3} parent=0 // pred_region
    _
  $region25: #{sgc_forward.3} parent=0 // pred_fallthru
    _

// kernel: sgc_forward.5
$region0: #{sgc_forward.5}
  #allocation0 [shape = 'u32[]', space=smem, size = 0x4, offset = 0x4, fixed_abs, tag = 'smem constant byte address 0x4 - core index']
  #allocation1 [shape = 'u32[144,128]{1,0:T(1,128)}', space=vmem, size = 0x12000, scoped, tag = 'internal scratch']
  #allocation2 [shape = 'f32[256,128]{1,0:T(8,128)}', space=vmem, size = 0x20000, scoped, tag = 'scratch operand']
  %s0 = inlined_call_operand.vmem [shape: bf16[256,128], index: 0, kind: input, shape index: {}]
  %s1 = inlined_call_operand.vmem [shape: bf16[256,256], index: 1, kind: input, shape index: {}]
  %s2 = inlined_call_operand.vmem [shape: f32[128,128], index: 2, kind: input, shape index: {}]
  %s3 = inlined_call_operand.vmem [shape: f32[1,128], index: 3, kind: input, shape index: {}]
  %s4 = inlined_call_operand.vmem [shape: f32[256,128], index: 4, kind: output, shape index: {}]
  %s5 = sld [smem:[#allocation0]]
  $region34: #{sgc_forward.5} parent=0
    _
  %s7 = ssub.s32 1, %s5
  %s8 = scalar_select 0, %s7, %s5
  // Predicated region
  $region2: #{sgc_forward.5} parent=0 // pred_check
    _
  $region3: #{sgc_forward.5} parent=0 // pred_check_branch
    %10 = sbr.rel (0) target = $region5
  $region4: #{sgc_forward.5} parent=0 // pred_region
    _
  $region5: #{sgc_forward.5} parent=0 // pred_fallthru
    _
  // Predicated region
  $region6: #{sgc_forward.5} parent=0 // pred_check
    _
  $region7: #{sgc_forward.5} parent=0 // pred_check_branch
    %12 = sbr.rel (0) target = $region9
  $region8: #{sgc_forward.5} parent=0 // pred_region
    _
  $region9: #{sgc_forward.5} parent=0 // pred_fallthru
    _
  // Predicated region
  $region10: #{sgc_forward.5} parent=0 // pred_check
    _
  $region11: #{sgc_forward.5} parent=0 // pred_check_branch
    %14 = sbr.rel (0) target = $region13
  $region12: #{sgc_forward.5} parent=0 // pred_region
    _
  $region13: #{sgc_forward.5} parent=0 // pred_fallthru
    _
  // Predicated region
  $region14: #{sgc_forward.5} parent=0 // pred_check
    _
  $region15: #{sgc_forward.5} parent=0 // pred_check_branch
    %16 = sbr.rel (0) target = $region17
  $region16: #{sgc_forward.5} parent=0 // pred_region
    _
  $region17: #{sgc_forward.5} parent=0 // pred_fallthru
    _
  %p18 = scmp.eq.s32.totalorder 0, 0
  // Predicated region
  $region18: #{sgc_forward.5} parent=0 // pred_check
    %p19 = pneg %p18
  $region19: #{sgc_forward.5} parent=0 // pred_check_branch
    %21 = sbr.rel (%p19) target = $region21
  $region20: #{sgc_forward.5} parent=0 // pred_region
    %22 = vst [vmem:[#allocation2] sm:$0xff] 0.0
    %23 = vst [vmem:[#allocation2 + $0x8] sm:$0xff] 0.0
    %24 = vst [vmem:[#allocation2 + $0x10] sm:$0xff] 0.0
    %25 = vst [vmem:[#allocation2 + $0x18] sm:$0xff] 0.0
    %26 = vst [vmem:[#allocation2 + $0x20] sm:$0xff] 0.0
    %27 = vst [vmem:[#allocation2 + $0x28] sm:$0xff] 0.0
    %28 = vst [vmem:[#allocation2 + $0x30] sm:$0xff] 0.0
    %29 = vst [vmem:[#allocation2 + $0x38] sm:$0xff] 0.0
    %30 = vst [vmem:[#allocation2 + $0x40] sm:$0xff] 0.0
    %31 = vst [vmem:[#allocation2 + $0x48] sm:$0xff] 0.0
    %32 = vst [vmem:[#allocation2 + $0x50] sm:$0xff] 0.0
    %33 = vst [vmem:[#allocation2 + $0x58] sm:$0xff] 0.0
    %34 = vst [vmem:[#allocation2 + $0x60] sm:$0xff] 0.0
    %35 = vst [vmem:[#allocation2 + $0x68] sm:$0xff] 0.0
    %36 = vst [vmem:[#allocation2 + $0x70] sm:$0xff] 0.0
    %37 = vst [vmem:[#allocation2 + $0x78] sm:$0xff] 0.0
    %38 = vst [vmem:[#allocation2 + $0x80] sm:$0xff] 0.0
    %39 = vst [vmem:[#allocation2 + $0x88] sm:$0xff] 0.0
    %40 = vst [vmem:[#allocation2 + $0x90] sm:$0xff] 0.0
    %41 = vst [vmem:[#allocation2 + $0x98] sm:$0xff] 0.0
    %42 = vst [vmem:[#allocation2 + $0xa0] sm:$0xff] 0.0
    %43 = vst [vmem:[#allocation2 + $0xa8] sm:$0xff] 0.0
    %44 = vst [vmem:[#allocation2 + $0xb0] sm:$0xff] 0.0
    %45 = vst [vmem:[#allocation2 + $0xb8] sm:$0xff] 0.0
    %46 = vst [vmem:[#allocation2 + $0xc0] sm:$0xff] 0.0
    %47 = vst [vmem:[#allocation2 + $0xc8] sm:$0xff] 0.0
    %48 = vst [vmem:[#allocation2 + $0xd0] sm:$0xff] 0.0
    %49 = vst [vmem:[#allocation2 + $0xd8] sm:$0xff] 0.0
    %50 = vst [vmem:[#allocation2 + $0xe0] sm:$0xff] 0.0
    %51 = vst [vmem:[#allocation2 + $0xe8] sm:$0xff] 0.0
    %52 = vst [vmem:[#allocation2 + $0xf0] sm:$0xff] 0.0
    %53 = vst [vmem:[#allocation2 + $0xf8] sm:$0xff] 0.0
  $region21: #{sgc_forward.5} parent=0 // pred_fallthru
    _
  %s54 = smul.u32 0, 256
  %s55 = sshra.s32 %s54, 3
  %s56 = sand.u32 %s54, 7
  %s57 = smul.addr %s55, 4
  %s58 = scalar_lea.vmem %s0, %s57
  %v59 = vld [vmem:[%s58] sm:$0xf]
  %v60 = vld [vmem:[%s58 + $0x4] sm:$0xf]
  %v61 = vld [vmem:[%s58 + $0x8] sm:$0xf]
  %v62 = vld [vmem:[%s58 + $0xc] sm:$0xf]
  %v63 = vld [vmem:[%s58 + $0x10] sm:$0xf]
  %v64 = vld [vmem:[%s58 + $0x14] sm:$0xf]
  %v65 = vld [vmem:[%s58 + $0x18] sm:$0xf]
  %v66 = vld [vmem:[%s58 + $0x1c] sm:$0xf]
  %v67 = vld [vmem:[%s58 + $0x20] sm:$0xf]
  %v68 = vld [vmem:[%s58 + $0x24] sm:$0xf]
  %v69 = vld [vmem:[%s58 + $0x28] sm:$0xf]
  %v70 = vld [vmem:[%s58 + $0x2c] sm:$0xf]
  %v71 = vld [vmem:[%s58 + $0x30] sm:$0xf]
  %v72 = vld [vmem:[%s58 + $0x34] sm:$0xf]
  %v73 = vld [vmem:[%s58 + $0x38] sm:$0xf]
  %v74 = vld [vmem:[%s58 + $0x3c] sm:$0xf]
  %v75 = vld [vmem:[%s58 + $0x40] sm:$0xf]
  %v76 = vld [vmem:[%s58 + $0x44] sm:$0xf]
  %v77 = vld [vmem:[%s58 + $0x48] sm:$0xf]
  %v78 = vld [vmem:[%s58 + $0x4c] sm:$0xf]
  %v79 = vld [vmem:[%s58 + $0x50] sm:$0xf]
  %v80 = vld [vmem:[%s58 + $0x54] sm:$0xf]
  %v81 = vld [vmem:[%s58 + $0x58] sm:$0xf]
  %v82 = vld [vmem:[%s58 + $0x5c] sm:$0xf]
  %v83 = vld [vmem:[%s58 + $0x60] sm:$0xf]
  %v84 = vld [vmem:[%s58 + $0x64] sm:$0xf]
  %v85 = vld [vmem:[%s58 + $0x68] sm:$0xf]
  %v86 = vld [vmem:[%s58 + $0x6c] sm:$0xf]
  %v87 = vld [vmem:[%s58 + $0x70] sm:$0xf]
  %v88 = vld [vmem:[%s58 + $0x74] sm:$0xf]
  %v89 = vld [vmem:[%s58 + $0x78] sm:$0xf]
  %v90 = vld [vmem:[%s58 + $0x7c] sm:$0xf]
  %v91 = vld [vmem:[#allocation2] sm:$0xff]
  %v92 = vld [vmem:[#allocation2 + $0x8] sm:$0xff]
  %v93 = vld [vmem:[#allocation2 + $0x10] sm:$0xff]
  %v94 = vld [vmem:[#allocation2 + $0x18] sm:$0xff]
  %v95 = vld [vmem:[#allocation2 + $0x20] sm:$0xff]
  %v96 = vld [vmem:[#allocation2 + $0x28] sm:$0xff]
  %v97 = vld [vmem:[#allocation2 + $0x30] sm:$0xff]
  %v98 = vld [vmem:[#allocation2 + $0x38] sm:$0xff]
  %v99 = vld [vmem:[#allocation2 + $0x40] sm:$0xff]
  %v100 = vld [vmem:[#allocation2 + $0x48] sm:$0xff]
  %v101 = vld [vmem:[#allocation2 + $0x50] sm:$0xff]
  %v102 = vld [vmem:[#allocation2 + $0x58] sm:$0xff]
  %v103 = vld [vmem:[#allocation2 + $0x60] sm:$0xff]
  %v104 = vld [vmem:[#allocation2 + $0x68] sm:$0xff]
  %v105 = vld [vmem:[#allocation2 + $0x70] sm:$0xff]
  %v106 = vld [vmem:[#allocation2 + $0x78] sm:$0xff]
  %v107 = vld [vmem:[#allocation2 + $0x80] sm:$0xff]
  %v108 = vld [vmem:[#allocation2 + $0x88] sm:$0xff]
  %v109 = vld [vmem:[#allocation2 + $0x90] sm:$0xff]
  %v110 = vld [vmem:[#allocation2 + $0x98] sm:$0xff]
  %v111 = vld [vmem:[#allocation2 + $0xa0] sm:$0xff]
  %v112 = vld [vmem:[#allocation2 + $0xa8] sm:$0xff]
  %v113 = vld [vmem:[#allocation2 + $0xb0] sm:$0xff]
  %v114 = vld [vmem:[#allocation2 + $0xb8] sm:$0xff]
  %v115 = vld [vmem:[#allocation2 + $0xc0] sm:$0xff]
  %v116 = vld [vmem:[#allocation2 + $0xc8] sm:$0xff]
  %v117 = vld [vmem:[#allocation2 + $0xd0] sm:$0xff]
  %v118 = vld [vmem:[#allocation2 + $0xd8] sm:$0xff]
  %v119 = vld [vmem:[#allocation2 + $0xe0] sm:$0xff]
  %v120 = vld [vmem:[#allocation2 + $0xe8] sm:$0xff]
  %v121 = vld [vmem:[#allocation2 + $0xf0] sm:$0xff]
  %v122 = vld [vmem:[#allocation2 + $0xf8] sm:$0xff]
  %v123 = vld [vmem:[%s1] sm:$0xff]
  %v124 = vld [vmem:[%s1 + $0x8] sm:$0xff]
  %v125 = vld [vmem:[%s1 + $0x10] sm:$0xff]
  %v126 = vld [vmem:[%s1 + $0x18] sm:$0xff]
  %v127 = vld [vmem:[%s1 + $0x20] sm:$0xff]
  %v128 = vld [vmem:[%s1 + $0x28] sm:$0xff]
  %v129 = vld [vmem:[%s1 + $0x30] sm:$0xff]
  %v130 = vld [vmem:[%s1 + $0x38] sm:$0xff]
  %v131 = vld [vmem:[%s1 + $0x40] sm:$0xff]
  %v132 = vld [vmem:[%s1 + $0x48] sm:$0xff]
  %v133 = vld [vmem:[%s1 + $0x50] sm:$0xff]
  %v134 = vld [vmem:[%s1 + $0x58] sm:$0xff]
  %v135 = vld [vmem:[%s1 + $0x60] sm:$0xff]
  %v136 = vld [vmem:[%s1 + $0x68] sm:$0xff]
  %v137 = vld [vmem:[%s1 + $0x70] sm:$0xff]
  %v138 = vld [vmem:[%s1 + $0x78] sm:$0xff]
  %v139 = vld [vmem:[%s1 + $0x80] sm:$0xff]
  %v140 = vld [vmem:[%s1 + $0x88] sm:$0xff]
  %v141 = vld [vmem:[%s1 + $0x90] sm:$0xff]
  %v142 = vld [vmem:[%s1 + $0x98] sm:$0xff]
  %v143 = vld [vmem:[%s1 + $0xa0] sm:$0xff]
  %v144 = vld [vmem:[%s1 + $0xa8] sm:$0xff]
  %v145 = vld [vmem:[%s1 + $0xb0] sm:$0xff]
  %v146 = vld [vmem:[%s1 + $0xb8] sm:$0xff]
  %v147 = vld [vmem:[%s1 + $0xc0] sm:$0xff]
  %v148 = vld [vmem:[%s1 + $0xc8] sm:$0xff]
  %v149 = vld [vmem:[%s1 + $0xd0] sm:$0xff]
  %v150 = vld [vmem:[%s1 + $0xd8] sm:$0xff]
  %v151 = vld [vmem:[%s1 + $0xe0] sm:$0xff]
  %v152 = vld [vmem:[%s1 + $0xe8] sm:$0xff]
  %v153 = vld [vmem:[%s1 + $0xf0] sm:$0xff]
  %v154 = vld [vmem:[%s1 + $0xf8] sm:$0xff]
  %v187 = vunpack.c.l.b16 %v123
  %v188 = vunpack.c.h.b16 %v123
  %v189 = vunpack.c.l.b16 %v124
  %v190 = vunpack.c.h.b16 %v124
  %v191 = vunpack.c.l.b16 %v125
  %v192 = vunpack.c.h.b16 %v125
  %v193 = vunpack.c.l.b16 %v126
  %v194 = vunpack.c.h.b16 %v126
  %v195 = vunpack.c.l.b16 %v127
  %v196 = vunpack.c.h.b16 %v127
  %v197 = vunpack.c.l.b16 %v128
  %v198 = vunpack.c.h.b16 %v128
  %v199 = vunpack.c.l.b16 %v129
  %v200 = vunpack.c.h.b16 %v129
  %v201 = vunpack.c.l.b16 %v130
  %v202 = vunpack.c.h.b16 %v130
  %v203 = vunpack.c.l.b16 %v131
  %v204 = vunpack.c.h.b16 %v131
  %v205 = vunpack.c.l.b16 %v132
  %v206 = vunpack.c.h.b16 %v132
  %v207 = vunpack.c.l.b16 %v133
  %v208 = vunpack.c.h.b16 %v133
  %v209 = vunpack.c.l.b16 %v134
  %v210 = vunpack.c.h.b16 %v134
  %v211 = vunpack.c.l.b16 %v135
  %v212 = vunpack.c.h.b16 %v135
  %v213 = vunpack.c.l.b16 %v136
  %v214 = vunpack.c.h.b16 %v136
  %v215 = vunpack.c.l.b16 %v137
  %v216 = vunpack.c.h.b16 %v137
  %v217 = vunpack.c.l.b16 %v138
  %v218 = vunpack.c.h.b16 %v138
  %v219 = vunpack.c.l.b16 %v139
  %v220 = vunpack.c.h.b16 %v139
  %v221 = vunpack.c.l.b16 %v140
  %v222 = vunpack.c.h.b16 %v140
  %v223 = vunpack.c.l.b16 %v141
  %v224 = vunpack.c.h.b16 %v141
  %v225 = vunpack.c.l.b16 %v142
  %v226 = vunpack.c.h.b16 %v142
  %v227 = vunpack.c.l.b16 %v143
  %v228 = vunpack.c.h.b16 %v143
  %v229 = vunpack.c.l.b16 %v144
  %v230 = vunpack.c.h.b16 %v144
  %v231 = vunpack.c.l.b16 %v145
  %v232 = vunpack.c.h.b16 %v145
  %v233 = vunpack.c.l.b16 %v146
  %v234 = vunpack.c.h.b16 %v146
  %v235 = vunpack.c.l.b16 %v147
  %v236 = vunpack.c.h.b16 %v147
  %v237 = vunpack.c.l.b16 %v148
  %v238 = vunpack.c.h.b16 %v148
  %v239 = vunpack.c.l.b16 %v149
  %v240 = vunpack.c.h.b16 %v149
  %v241 = vunpack.c.l.b16 %v150
  %v242 = vunpack.c.h.b16 %v150
  %v243 = vunpack.c.l.b16 %v151
  %v244 = vunpack.c.h.b16 %v151
  %v245 = vunpack.c.l.b16 %v152
  %v246 = vunpack.c.h.b16 %v152
  %v247 = vunpack.c.l.b16 %v153
  %v248 = vunpack.c.h.b16 %v153
  %v249 = vunpack.c.l.b16 %v154
  %v250 = vunpack.c.h.b16 %v154
  %v251 = vpack.c.b16 %v189, %v187
  %v252 = vpack.c.b16 %v190, %v188
  %v253 = vpack.c.b16 %v193, %v191
  %v254 = vpack.c.b16 %v194, %v192
  %v255 = vpack.c.b16 %v197, %v195
  %v256 = vpack.c.b16 %v198, %v196
  %v257 = vpack.c.b16 %v201, %v199
  %v258 = vpack.c.b16 %v202, %v200
  %v259 = vpack.c.b16 %v205, %v203
  %v260 = vpack.c.b16 %v206, %v204
  %v261 = vpack.c.b16 %v209, %v207
  %v262 = vpack.c.b16 %v210, %v208
  %v263 = vpack.c.b16 %v213, %v211
  %v264 = vpack.c.b16 %v214, %v212
  %v265 = vpack.c.b16 %v217, %v215
  %v266 = vpack.c.b16 %v218, %v216
  %v267 = vpack.c.b16 %v221, %v219
  %v268 = vpack.c.b16 %v222, %v220
  %v269 = vpack.c.b16 %v225, %v223
  %v270 = vpack.c.b16 %v226, %v224
  %v271 = vpack.c.b16 %v229, %v227
  %v272 = vpack.c.b16 %v230, %v228
  %v273 = vpack.c.b16 %v233, %v231
  %v274 = vpack.c.b16 %v234, %v232
  %v275 = vpack.c.b16 %v237, %v235
  %v276 = vpack.c.b16 %v238, %v236
  %v277 = vpack.c.b16 %v241, %v239
  %v278 = vpack.c.b16 %v242, %v240
  %v279 = vpack.c.b16 %v245, %v243
  %v280 = vpack.c.b16 %v246, %v244
  %v281 = vpack.c.b16 %v249, %v247
  %v282 = vpack.c.b16 %v250, %v248
  %v347 = vunpack.c.l.b16 %v59
  %v348 = vunpack.c.l.b16 %v60
  %v349 = vunpack.c.l.b16 %v61
  %v350 = vunpack.c.l.b16 %v62
  %v351 = vunpack.c.l.b16 %v63
  %v352 = vunpack.c.l.b16 %v64
  %v353 = vunpack.c.l.b16 %v65
  %v354 = vunpack.c.l.b16 %v66
  %v355 = vunpack.c.l.b16 %v67
  %v356 = vunpack.c.l.b16 %v68
  %v357 = vunpack.c.l.b16 %v69
  %v358 = vunpack.c.l.b16 %v70
  %v359 = vunpack.c.l.b16 %v71
  %v360 = vunpack.c.l.b16 %v72
  %v361 = vunpack.c.l.b16 %v73
  %v362 = vunpack.c.l.b16 %v74
  %v363 = vunpack.c.l.b16 %v75
  %v364 = vunpack.c.l.b16 %v76
  %v365 = vunpack.c.l.b16 %v77
  %v366 = vunpack.c.l.b16 %v78
  %v367 = vunpack.c.l.b16 %v79
  %v368 = vunpack.c.l.b16 %v80
  %v369 = vunpack.c.l.b16 %v81
  %v370 = vunpack.c.l.b16 %v82
  %v371 = vunpack.c.l.b16 %v83
  %v372 = vunpack.c.l.b16 %v84
  %v373 = vunpack.c.l.b16 %v85
  %v374 = vunpack.c.l.b16 %v86
  %v375 = vunpack.c.l.b16 %v87
  %v376 = vunpack.c.l.b16 %v88
  %v377 = vunpack.c.l.b16 %v89
  %v378 = vunpack.c.l.b16 %v90
  %v379 = vpack.c.b16 %v348, %v347
  %v380 = vpack.c.b16 %v350, %v349
  %v381 = vpack.c.b16 %v352, %v351
  %v382 = vpack.c.b16 %v354, %v353
  %v383 = vpack.c.b16 %v356, %v355
  %v384 = vpack.c.b16 %v358, %v357
  %v385 = vpack.c.b16 %v360, %v359
  %v386 = vpack.c.b16 %v362, %v361
  %v387 = vpack.c.b16 %v364, %v363
  %v388 = vpack.c.b16 %v366, %v365
  %v389 = vpack.c.b16 %v368, %v367
  %v390 = vpack.c.b16 %v370, %v369
  %v391 = vpack.c.b16 %v372, %v371
  %v392 = vpack.c.b16 %v374, %v373
  %v393 = vpack.c.b16 %v376, %v375
  %v394 = vpack.c.b16 %v378, %v377
  %411 = vmatprep.subr.bf16.mxu0 0
  %412 = vmatpush1.bf16.msra.mxu0 %v379
  %413 = vmatprep.subr.bf16.mxu0 0
  %414 = vmatpush1.bf16.msra.mxu0 %v380
  %415 = vmatprep.subr.bf16.mxu0 0
  %416 = vmatpush1.bf16.msra.mxu0 %v381
  %417 = vmatprep.subr.bf16.mxu0 0
  %418 = vmatpush1.bf16.msra.mxu0 %v382
  %419 = vmatprep.subr.bf16.mxu0 0
  %420 = vmatpush1.bf16.msra.mxu0 %v383
  %421 = vmatprep.subr.bf16.mxu0 0
  %422 = vmatpush1.bf16.msra.mxu0 %v384
  %423 = vmatprep.subr.bf16.mxu0 0
  %424 = vmatpush1.bf16.msra.mxu0 %v385
  %425 = vmatprep.subr.bf16.mxu0 0
  %426 = vmatpush1.bf16.msra.mxu0 %v386
  %427 = vmatprep.subr.bf16.mxu0 0
  %428 = vmatpush1.bf16.msra.mxu0 %v387
  %429 = vmatprep.subr.bf16.mxu0 0
  %430 = vmatpush1.bf16.msra.mxu0 %v388
  %431 = vmatprep.subr.bf16.mxu0 0
  %432 = vmatpush1.bf16.msra.mxu0 %v389
  %433 = vmatprep.subr.bf16.mxu0 0
  %434 = vmatpush1.bf16.msra.mxu0 %v390
  %435 = vmatprep.subr.bf16.mxu0 0
  %436 = vmatpush1.bf16.msra.mxu0 %v391
  %437 = vmatprep.subr.bf16.mxu0 0
  %438 = vmatpush1.bf16.msra.mxu0 %v392
  %439 = vmatprep.subr.bf16.mxu0 0
  %440 = vmatpush1.bf16.msra.mxu0 %v393
  %441 = vmatprep.subr.bf16.mxu0 0
  %442 = vmatpush1.bf16.msra.mxu0 %v394
  %443 = vmatprep.mubr.bf16.mxu0 %v252
  %444 = vmatmul.mubr.bf16.gmra.mrb[0].mxu0 %v251
  %v445 = vpop.f32.mrb[0].mxu0
  %v446 = vadd.f32 0.0, %v445
  %v447 = vpop.f32.mrb[0].mxu0
  %v448 = vpop.f32.mrb[0].mxu0
  %v449 = vadd.f32 0.0, %v448
  %v450 = vpop.f32.mrb[0].mxu0
  %451 = vmatprep.mubr.bf16.mxu0 %v254
  %452 = vmatmul.mubr.bf16.gmra.mrb[0].mxu0 %v253
  %v453 = vpop.f32.mrb[0].mxu0
  %v454 = vadd.f32 0.0, %v453
  %v455 = vpop.f32.mrb[0].mxu0
  %v456 = vpop.f32.mrb[0].mxu0
  %v457 = vadd.f32 0.0, %v456
  %v458 = vpop.f32.mrb[0].mxu0
  %459 = vmatprep.mubr.bf16.mxu0 %v256
  %460 = vmatmul.mubr.bf16.gmra.mrb[0].mxu0 %v255
  %v461 = vpop.f32.mrb[0].mxu0
  %v462 = vadd.f32 0.0, %v461
  %v463 = vpop.f32.mrb[0].mxu0
  %v464 = vpop.f32.mrb[0].mxu0
  %v465 = vadd.f32 0.0, %v464
  %v466 = vpop.f32.mrb[0].mxu0
  %467 = vmatprep.mubr.bf16.mxu0 %v258
  %468 = vmatmul.mubr.bf16.gmra.mrb[0].mxu0 %v257
  %v469 = vpop.f32.mrb[0].mxu0
  %v470 = vadd.f32 0.0, %v469
  %v471 = vpop.f32.mrb[0].mxu0
  %v472 = vpop.f32.mrb[0].mxu0
  %v473 = vadd.f32 0.0, %v472
  %v474 = vpop.f32.mrb[0].mxu0
  %475 = vmatprep.mubr.bf16.mxu0 %v260
  %476 = vmatmul.mubr.bf16.gmra.mrb[0].mxu0 %v259
  %v477 = vpop.f32.mrb[0].mxu0
  %v478 = vadd.f32 0.0, %v477
  %v479 = vpop.f32.mrb[0].mxu0
  %v480 = vpop.f32.mrb[0].mxu0
  %v481 = vadd.f32 0.0, %v480
  %v482 = vpop.f32.mrb[0].mxu0
  %483 = vmatprep.mubr.bf16.mxu0 %v262
  %484 = vmatmul.mubr.bf16.gmra.mrb[0].mxu0 %v261
  %v485 = vpop.f32.mrb[0].mxu0
  %v486 = vadd.f32 0.0, %v485
  %v487 = vpop.f32.mrb[0].mxu0
  %v488 = vpop.f32.mrb[0].mxu0
  %v489 = vadd.f32 0.0, %v488
  %v490 = vpop.f32.mrb[0].mxu0
  %491 = vmatprep.mubr.bf16.mxu0 %v264
  %492 = vmatmul.mubr.bf16.gmra.mrb[0].mxu0 %v263
  %v493 = vpop.f32.mrb[0].mxu0
  %v494 = vadd.f32 0.0, %v493
  %v495 = vpop.f32.mrb[0].mxu0
  %v496 = vpop.f32.mrb[0].mxu0
  %v497 = vadd.f32 0.0, %v496
  %v498 = vpop.f32.mrb[0].mxu0
  %499 = vmatprep.mubr.bf16.mxu0 %v266
  %500 = vmatmul.mubr.bf16.gmra.mrb[0].mxu0 %v265
  %v501 = vpop.f32.mrb[0].mxu0
  %v502 = vadd.f32 0.0, %v501
  %v503 = vpop.f32.mrb[0].mxu0
  %v504 = vpop.f32.mrb[0].mxu0
  %v505 = vadd.f32 0.0, %v504
  %v506 = vpop.f32.mrb[0].mxu0
  %507 = vmatprep.mubr.bf16.mxu0 %v268
  %508 = vmatmul.mubr.bf16.gmra.mrb[0].mxu0 %v267
  %v509 = vpop.f32.mrb[0].mxu0
  %v510 = vadd.f32 0.0, %v509
  %v511 = vpop.f32.mrb[0].mxu0
  %v512 = vpop.f32.mrb[0].mxu0
  %v513 = vadd.f32 0.0, %v512
  %v514 = vpop.f32.mrb[0].mxu0
  %515 = vmatprep.mubr.bf16.mxu0 %v270
  %516 = vmatmul.mubr.bf16.gmra.mrb[0].mxu0 %v269
  %v517 = vpop.f32.mrb[0].mxu0
  %v518 = vadd.f32 0.0, %v517
  %v519 = vpop.f32.mrb[0].mxu0
  %v520 = vpop.f32.mrb[0].mxu0
  %v521 = vadd.f32 0.0, %v520
  %v522 = vpop.f32.mrb[0].mxu0
  %523 = vmatprep.mubr.bf16.mxu0 %v272
  %524 = vmatmul.mubr.bf16.gmra.mrb[0].mxu0 %v271
  %v525 = vpop.f32.mrb[0].mxu0
  %v526 = vadd.f32 0.0, %v525
  %v527 = vpop.f32.mrb[0].mxu0
  %v528 = vpop.f32.mrb[0].mxu0
  %v529 = vadd.f32 0.0, %v528
  %v530 = vpop.f32.mrb[0].mxu0
  %531 = vmatprep.mubr.bf16.mxu0 %v274
  %532 = vmatmul.mubr.bf16.gmra.mrb[0].mxu0 %v273
  %v533 = vpop.f32.mrb[0].mxu0
  %v534 = vadd.f32 0.0, %v533
  %v535 = vpop.f32.mrb[0].mxu0
  %v536 = vpop.f32.mrb[0].mxu0
  %v537 = vadd.f32 0.0, %v536
  %v538 = vpop.f32.mrb[0].mxu0
  %539 = vmatprep.mubr.bf16.mxu0 %v276
  %540 = vmatmul.mubr.bf16.gmra.mrb[0].mxu0 %v275
  %v541 = vpop.f32.mrb[0].mxu0
  %v542 = vadd.f32 0.0, %v541
  %v543 = vpop.f32.mrb[0].mxu0
  %v544 = vpop.f32.mrb[0].mxu0
  %v545 = vadd.f32 0.0, %v544
  %v546 = vpop.f32.mrb[0].mxu0
  %547 = vmatprep.mubr.bf16.mxu0 %v278
  %548 = vmatmul.mubr.bf16.gmra.mrb[0].mxu0 %v277
  %v549 = vpop.f32.mrb[0].mxu0
  %v550 = vadd.f32 0.0, %v549
  %v551 = vpop.f32.mrb[0].mxu0
  %v552 = vpop.f32.mrb[0].mxu0
  %v553 = vadd.f32 0.0, %v552
  %v554 = vpop.f32.mrb[0].mxu0
  %555 = vmatprep.mubr.bf16.mxu0 %v280
  %556 = vmatmul.mubr.bf16.gmra.mrb[0].mxu0 %v279
  %v557 = vpop.f32.mrb[0].mxu0
  %v558 = vadd.f32 0.0, %v557
  %v559 = vpop.f32.mrb[0].mxu0
  %v560 = vpop.f32.mrb[0].mxu0
  %v561 = vadd.f32 0.0, %v560
  %v562 = vpop.f32.mrb[0].mxu0
  %563 = vmatprep.mubr.bf16.mxu0 %v282
  %564 = vmatmul.mubr.bf16.gmra.mrb[0].mxu0 %v281
  %v565 = vpop.f32.mrb[0].mxu0
  %v566 = vadd.f32 0.0, %v565
  %v567 = vpop.f32.mrb[0].mxu0
  %v568 = vpop.f32.mrb[0].mxu0
  %v569 = vadd.f32 0.0, %v568
  %v570 = vpop.f32.mrb[0].mxu0
  %571 = vdwg.mxu0
  %v572 = vadd.f32 %v91, %v446
  %v573 = vadd.f32 %v92, %v449
  %v574 = vadd.f32 %v93, %v454
  %v575 = vadd.f32 %v94, %v457
  %v576 = vadd.f32 %v95, %v462
  %v577 = vadd.f32 %v96, %v465
  %v578 = vadd.f32 %v97, %v470
  %v579 = vadd.f32 %v98, %v473
  %v580 = vadd.f32 %v99, %v478
  %v581 = vadd.f32 %v100, %v481
  %v582 = vadd.f32 %v101, %v486
  %v583 = vadd.f32 %v102, %v489
  %v584 = vadd.f32 %v103, %v494
  %v585 = vadd.f32 %v104, %v497
  %v586 = vadd.f32 %v105, %v502
  %v587 = vadd.f32 %v106, %v505
  %v588 = vadd.f32 %v107, %v510
  %v589 = vadd.f32 %v108, %v513
  %v590 = vadd.f32 %v109, %v518
  %v591 = vadd.f32 %v110, %v521
  %v592 = vadd.f32 %v111, %v526
  %v593 = vadd.f32 %v112, %v529
  %v594 = vadd.f32 %v113, %v534
  %v595 = vadd.f32 %v114, %v537
  %v596 = vadd.f32 %v115, %v542
  %v597 = vadd.f32 %v116, %v545
  %v598 = vadd.f32 %v117, %v550
  %v599 = vadd.f32 %v118, %v553
  %v600 = vadd.f32 %v119, %v558
  %v601 = vadd.f32 %v120, %v561
  %v602 = vadd.f32 %v121, %v566
  %v603 = vadd.f32 %v122, %v569
  %604 = vst [vmem:[#allocation2] sm:$0xff] %v572
  %605 = vst [vmem:[#allocation2 + $0x8] sm:$0xff] %v573
  %606 = vst [vmem:[#allocation2 + $0x10] sm:$0xff] %v574
  %607 = vst [vmem:[#allocation2 + $0x18] sm:$0xff] %v575
  %608 = vst [vmem:[#allocation2 + $0x20] sm:$0xff] %v576
  %609 = vst [vmem:[#allocation2 + $0x28] sm:$0xff] %v577
  %610 = vst [vmem:[#allocation2 + $0x30] sm:$0xff] %v578
  %611 = vst [vmem:[#allocation2 + $0x38] sm:$0xff] %v579
  %612 = vst [vmem:[#allocation2 + $0x40] sm:$0xff] %v580
  %613 = vst [vmem:[#allocation2 + $0x48] sm:$0xff] %v581
  %614 = vst [vmem:[#allocation2 + $0x50] sm:$0xff] %v582
  %615 = vst [vmem:[#allocation2 + $0x58] sm:$0xff] %v583
  %616 = vst [vmem:[#allocation2 + $0x60] sm:$0xff] %v584
  %617 = vst [vmem:[#allocation2 + $0x68] sm:$0xff] %v585
  %618 = vst [vmem:[#allocation2 + $0x70] sm:$0xff] %v586
  %619 = vst [vmem:[#allocation2 + $0x78] sm:$0xff] %v587
  %620 = vst [vmem:[#allocation2 + $0x80] sm:$0xff] %v588
  %621 = vst [vmem:[#allocation2 + $0x88] sm:$0xff] %v589
  %622 = vst [vmem:[#allocation2 + $0x90] sm:$0xff] %v590
  %623 = vst [vmem:[#allocation2 + $0x98] sm:$0xff] %v591
  %624 = vst [vmem:[#allocation2 + $0xa0] sm:$0xff] %v592
  %625 = vst [vmem:[#allocation2 + $0xa8] sm:$0xff] %v593
  %626 = vst [vmem:[#allocation2 + $0xb0] sm:$0xff] %v594
  %627 = vst [vmem:[#allocation2 + $0xb8] sm:$0xff] %v595
  %628 = vst [vmem:[#allocation2 + $0xc0] sm:$0xff] %v596
  %629 = vst [vmem:[#allocation2 + $0xc8] sm:$0xff] %v597
  %630 = vst [vmem:[#allocation2 + $0xd0] sm:$0xff] %v598
  %631 = vst [vmem:[#allocation2 + $0xd8] sm:$0xff] %v599
  %632 = vst [vmem:[#allocation2 + $0xe0] sm:$0xff] %v600
  %633 = vst [vmem:[#allocation2 + $0xe8] sm:$0xff] %v601
  %634 = vst [vmem:[#allocation2 + $0xf0] sm:$0xff] %v602
  %635 = vst [vmem:[#allocation2 + $0xf8] sm:$0xff] %v603
  // Predicated region
  $region22: #{sgc_forward.5} parent=0 // pred_check
    %p636 = pneg %p18
  $region23: #{sgc_forward.5} parent=0 // pred_check_branch
    %638 = sbr.rel (%p636) target = $region25
  $region24: #{sgc_forward.5} parent=0 // pred_region
    %v639 = vld [vmem:[#allocation2] sm:$0xff]
    %v640 = vld [vmem:[#allocation2 + $0x8] sm:$0xff]
    %v641 = vld [vmem:[#allocation2 + $0x10] sm:$0xff]
    %v642 = vld [vmem:[#allocation2 + $0x18] sm:$0xff]
    %v643 = vld [vmem:[#allocation2 + $0x20] sm:$0xff]
    %v644 = vld [vmem:[#allocation2 + $0x28] sm:$0xff]
    %v645 = vld [vmem:[#allocation2 + $0x30] sm:$0xff]
    %v646 = vld [vmem:[#allocation2 + $0x38] sm:$0xff]
    %v647 = vld [vmem:[#allocation2 + $0x40] sm:$0xff]
    %v648 = vld [vmem:[#allocation2 + $0x48] sm:$0xff]
    %v649 = vld [vmem:[#allocation2 + $0x50] sm:$0xff]
    %v650 = vld [vmem:[#allocation2 + $0x58] sm:$0xff]
    %v651 = vld [vmem:[#allocation2 + $0x60] sm:$0xff]
    %v652 = vld [vmem:[#allocation2 + $0x68] sm:$0xff]
    %v653 = vld [vmem:[#allocation2 + $0x70] sm:$0xff]
    %v654 = vld [vmem:[#allocation2 + $0x78] sm:$0xff]
    %v655 = vld [vmem:[#allocation2 + $0x80] sm:$0xff]
    %v656 = vld [vmem:[#allocation2 + $0x88] sm:$0xff]
    %v657 = vld [vmem:[#allocation2 + $0x90] sm:$0xff]
    %v658 = vld [vmem:[#allocation2 + $0x98] sm:$0xff]
    %v659 = vld [vmem:[#allocation2 + $0xa0] sm:$0xff]
    %v660 = vld [vmem:[#allocation2 + $0xa8] sm:$0xff]
    %v661 = vld [vmem:[#allocation2 + $0xb0] sm:$0xff]
    %v662 = vld [vmem:[#allocation2 + $0xb8] sm:$0xff]
    %v663 = vld [vmem:[#allocation2 + $0xc0] sm:$0xff]
    %v664 = vld [vmem:[#allocation2 + $0xc8] sm:$0xff]
    %v665 = vld [vmem:[#allocation2 + $0xd0] sm:$0xff]
    %v666 = vld [vmem:[#allocation2 + $0xd8] sm:$0xff]
    %v667 = vld [vmem:[#allocation2 + $0xe0] sm:$0xff]
    %v668 = vld [vmem:[#allocation2 + $0xe8] sm:$0xff]
    %v669 = vld [vmem:[#allocation2 + $0xf0] sm:$0xff]
    %v670 = vld [vmem:[#allocation2 + $0xf8] sm:$0xff]
    %v671 = vld [vmem:[%s2] sm:$0xff]
    %v672 = vld [vmem:[%s2 + $0x8] sm:$0xff]
    %v673 = vld [vmem:[%s2 + $0x10] sm:$0xff]
    %v674 = vld [vmem:[%s2 + $0x18] sm:$0xff]
    %v675 = vld [vmem:[%s2 + $0x20] sm:$0xff]
    %v676 = vld [vmem:[%s2 + $0x28] sm:$0xff]
    %v677 = vld [vmem:[%s2 + $0x30] sm:$0xff]
    %v678 = vld [vmem:[%s2 + $0x38] sm:$0xff]
    %v679 = vld [vmem:[%s2 + $0x40] sm:$0xff]
    %v680 = vld [vmem:[%s2 + $0x48] sm:$0xff]
    %v681 = vld [vmem:[%s2 + $0x50] sm:$0xff]
    %v682 = vld [vmem:[%s2 + $0x58] sm:$0xff]
    %v683 = vld [vmem:[%s2 + $0x60] sm:$0xff]
    %v684 = vld [vmem:[%s2 + $0x68] sm:$0xff]
    %v685 = vld [vmem:[%s2 + $0x70] sm:$0xff]
    %v686 = vld [vmem:[%s2 + $0x78] sm:$0xff]
    %v687 = vld [vmem:[%s3] sm:$0x1]
    %v689 = vlaneseq
    %v690 = vshrl.u32 %v689, 7
    %v691 = vsub.s32 0, %v690
    %v692 = vrot.slane %v687, %v691
    %694 = vmatprep.subr.mxu0 0.0
    %695 = vmatpush1.msra.mxu0 %v671
    %696 = vmatprep.subr.mxu0 0.0
    %697 = vmatpush1.msra.mxu0 %v672
    %698 = vmatprep.subr.mxu0 0.0
    %699 = vmatpush1.msra.mxu0 %v673
    %700 = vmatprep.subr.mxu0 0.0
    %701 = vmatpush1.msra.mxu0 %v674
    %702 = vmatprep.subr.mxu0 0.0
    %703 = vmatpush1.msra.mxu0 %v675
    %704 = vmatprep.subr.mxu0 0.0
    %705 = vmatpush1.msra.mxu0 %v676
    %706 = vmatprep.subr.mxu0 0.0
    %707 = vmatpush1.msra.mxu0 %v677
    %708 = vmatprep.subr.mxu0 0.0
    %709 = vmatpush1.msra.mxu0 %v678
    %710 = vmatprep.subr.mxu0 0.0
    %711 = vmatpush1.msra.mxu0 %v679
    %712 = vmatprep.subr.mxu0 0.0
    %713 = vmatpush1.msra.mxu0 %v680
    %714 = vmatprep.subr.mxu0 0.0
    %715 = vmatpush1.msra.mxu0 %v681
    %716 = vmatprep.subr.mxu0 0.0
    %717 = vmatpush1.msra.mxu0 %v682
    %718 = vmatprep.subr.mxu0 0.0
    %719 = vmatpush1.msra.mxu0 %v683
    %720 = vmatprep.subr.mxu0 0.0
    %721 = vmatpush1.msra.mxu0 %v684
    %722 = vmatprep.subr.mxu0 0.0
    %723 = vmatpush1.msra.mxu0 %v685
    %724 = vmatprep.subr.mxu0 0.0
    %725 = vmatpush1.msra.mxu0 %v686
    %726 = vmatprep.subr.mxu0 0.0
    %727 = vmatpush1.msra.mxu0 0.0
    %728 = vmatprep.subr.mxu0 0.0
    %729 = vmatpush1.msra.mxu0 0.0
    %730 = vmatprep.subr.mxu0 0.0
    %731 = vmatpush1.msra.mxu0 0.0
    %732 = vmatprep.subr.mxu0 0.0
    %733 = vmatpush1.msra.mxu0 0.0
    %734 = vmatprep.subr.mxu0 0.0
    %735 = vmatpush1.msra.mxu0 0.0
    %736 = vmatprep.subr.mxu0 0.0
    %737 = vmatpush1.msra.mxu0 0.0
    %738 = vmatprep.subr.mxu0 0.0
    %739 = vmatpush1.msra.mxu0 0.0
    %740 = vmatprep.subr.mxu0 0.0
    %741 = vmatpush1.msra.mxu0 0.0
    %742 = vmatprep.subr.mxu0 0.0
    %743 = vmatpush1.msra.mxu0 0.0
    %744 = vmatprep.subr.mxu0 0.0
    %745 = vmatpush1.msra.mxu0 0.0
    %746 = vmatprep.subr.mxu0 0.0
    %747 = vmatpush1.msra.mxu0 0.0
    %748 = vmatprep.subr.mxu0 0.0
    %749 = vmatpush1.msra.mxu0 0.0
    %750 = vmatprep.subr.mxu0 0.0
    %751 = vmatpush1.msra.mxu0 0.0
    %752 = vmatprep.subr.mxu0 0.0
    %753 = vmatpush1.msra.mxu0 0.0
    %754 = vmatprep.subr.mxu0 0.0
    %755 = vmatpush1.msra.mxu0 0.0
    %756 = vmatprep.subr.mxu0 0.0
    %757 = vmatpush1.msra.mxu0 0.0
    %758 = vmatprep.mubr.f32.mxu0 0.0
    %759 = vmatmul.mubr.f32.gmra.mrb[0].mxu0 %v639
    %v760 = vpop.f32.mrb[0].mxu0
    %v761 = vadd.f32 %v692, %v760
    %v762 = vpop.f32.mrb[0].mxu0
    %763 = vmatprep.mubr.f32.mxu0 0.0
    %764 = vmatmul.mubr.f32.gmra.mrb[0].mxu0 %v640
    %v765 = vpop.f32.mrb[0].mxu0
    %v766 = vadd.f32 %v692, %v765
    %v767 = vpop.f32.mrb[0].mxu0
    %768 = vmatprep.mubr.f32.mxu0 0.0
    %769 = vmatmul.mubr.f32.gmra.mrb[0].mxu0 %v641
    %v770 = vpop.f32.mrb[0].mxu0
    %v771 = vadd.f32 %v692, %v770
    %v772 = vpop.f32.mrb[0].mxu0
    %773 = vmatprep.mubr.f32.mxu0 0.0
    %774 = vmatmul.mubr.f32.gmra.mrb[0].mxu0 %v642
    %v775 = vpop.f32.mrb[0].mxu0
    %v776 = vadd.f32 %v692, %v775
    %v777 = vpop.f32.mrb[0].mxu0
    %778 = vmatprep.mubr.f32.mxu0 0.0
    %779 = vmatmul.mubr.f32.gmra.mrb[0].mxu0 %v643
    %v780 = vpop.f32.mrb[0].mxu0
    %v781 = vadd.f32 %v692, %v780
    %v782 = vpop.f32.mrb[0].mxu0
    %783 = vmatprep.mubr.f32.mxu0 0.0
    %784 = vmatmul.mubr.f32.gmra.mrb[0].mxu0 %v644
    %v785 = vpop.f32.mrb[0].mxu0
    %v786 = vadd.f32 %v692, %v785
    %v787 = vpop.f32.mrb[0].mxu0
    %788 = vmatprep.mubr.f32.mxu0 0.0
    %789 = vmatmul.mubr.f32.gmra.mrb[0].mxu0 %v645
    %v790 = vpop.f32.mrb[0].mxu0
    %v791 = vadd.f32 %v692, %v790
    %v792 = vpop.f32.mrb[0].mxu0
    %793 = vmatprep.mubr.f32.mxu0 0.0
    %794 = vmatmul.mubr.f32.gmra.mrb[0].mxu0 %v646
    %v795 = vpop.f32.mrb[0].mxu0
    %v796 = vadd.f32 %v692, %v795
    %v797 = vpop.f32.mrb[0].mxu0
    %798 = vmatprep.mubr.f32.mxu0 0.0
    %799 = vmatmul.mubr.f32.gmra.mrb[0].mxu0 %v647
    %v800 = vpop.f32.mrb[0].mxu0
    %v801 = vadd.f32 %v692, %v800
    %v802 = vpop.f32.mrb[0].mxu0
    %803 = vmatprep.mubr.f32.mxu0 0.0
    %804 = vmatmul.mubr.f32.gmra.mrb[0].mxu0 %v648
    %v805 = vpop.f32.mrb[0].mxu0
    %v806 = vadd.f32 %v692, %v805
    %v807 = vpop.f32.mrb[0].mxu0
    %808 = vmatprep.mubr.f32.mxu0 0.0
    %809 = vmatmul.mubr.f32.gmra.mrb[0].mxu0 %v649
    %v810 = vpop.f32.mrb[0].mxu0
    %v811 = vadd.f32 %v692, %v810
    %v812 = vpop.f32.mrb[0].mxu0
    %813 = vmatprep.mubr.f32.mxu0 0.0
    %814 = vmatmul.mubr.f32.gmra.mrb[0].mxu0 %v650
    %v815 = vpop.f32.mrb[0].mxu0
    %v816 = vadd.f32 %v692, %v815
    %v817 = vpop.f32.mrb[0].mxu0
    %818 = vmatprep.mubr.f32.mxu0 0.0
    %819 = vmatmul.mubr.f32.gmra.mrb[0].mxu0 %v651
    %v820 = vpop.f32.mrb[0].mxu0
    %v821 = vadd.f32 %v692, %v820
    %v822 = vpop.f32.mrb[0].mxu0
    %823 = vmatprep.mubr.f32.mxu0 0.0
    %824 = vmatmul.mubr.f32.gmra.mrb[0].mxu0 %v652
    %v825 = vpop.f32.mrb[0].mxu0
    %v826 = vadd.f32 %v692, %v825
    %v827 = vpop.f32.mrb[0].mxu0
    %828 = vmatprep.mubr.f32.mxu0 0.0
    %829 = vmatmul.mubr.f32.gmra.mrb[0].mxu0 %v653
    %v830 = vpop.f32.mrb[0].mxu0
    %v831 = vadd.f32 %v692, %v830
    %v832 = vpop.f32.mrb[0].mxu0
    %833 = vmatprep.mubr.f32.mxu0 0.0
    %834 = vmatmul.mubr.f32.gmra.mrb[0].mxu0 %v654
    %v835 = vpop.f32.mrb[0].mxu0
    %v836 = vadd.f32 %v692, %v835
    %v837 = vpop.f32.mrb[0].mxu0
    %838 = vmatprep.mubr.f32.mxu0 0.0
    %839 = vmatmul.mubr.f32.gmra.mrb[0].mxu0 %v655
    %v840 = vpop.f32.mrb[0].mxu0
    %v841 = vadd.f32 %v692, %v840
    %v842 = vpop.f32.mrb[0].mxu0
    %843 = vmatprep.mubr.f32.mxu0 0.0
    %844 = vmatmul.mubr.f32.gmra.mrb[0].mxu0 %v656
    %v845 = vpop.f32.mrb[0].mxu0
    %v846 = vadd.f32 %v692, %v845
    %v847 = vpop.f32.mrb[0].mxu0
    %848 = vmatprep.mubr.f32.mxu0 0.0
    %849 = vmatmul.mubr.f32.gmra.mrb[0].mxu0 %v657
    %v850 = vpop.f32.mrb[0].mxu0
    %v851 = vadd.f32 %v692, %v850
    %v852 = vpop.f32.mrb[0].mxu0
    %853 = vmatprep.mubr.f32.mxu0 0.0
    %854 = vmatmul.mubr.f32.gmra.mrb[0].mxu0 %v658
    %v855 = vpop.f32.mrb[0].mxu0
    %v856 = vadd.f32 %v692, %v855
    %v857 = vpop.f32.mrb[0].mxu0
    %858 = vmatprep.mubr.f32.mxu0 0.0
    %859 = vmatmul.mubr.f32.gmra.mrb[0].mxu0 %v659
    %v860 = vpop.f32.mrb[0].mxu0
    %v861 = vadd.f32 %v692, %v860
    %v862 = vpop.f32.mrb[0].mxu0
    %863 = vmatprep.mubr.f32.mxu0 0.0
    %864 = vmatmul.mubr.f32.gmra.mrb[0].mxu0 %v660
    %v865 = vpop.f32.mrb[0].mxu0
    %v866 = vadd.f32 %v692, %v865
    %v867 = vpop.f32.mrb[0].mxu0
    %868 = vmatprep.mubr.f32.mxu0 0.0
    %869 = vmatmul.mubr.f32.gmra.mrb[0].mxu0 %v661
    %v870 = vpop.f32.mrb[0].mxu0
    %v871 = vadd.f32 %v692, %v870
    %v872 = vpop.f32.mrb[0].mxu0
    %873 = vmatprep.mubr.f32.mxu0 0.0
    %874 = vmatmul.mubr.f32.gmra.mrb[0].mxu0 %v662
    %v875 = vpop.f32.mrb[0].mxu0
    %v876 = vadd.f32 %v692, %v875
    %v877 = vpop.f32.mrb[0].mxu0
    %878 = vmatprep.mubr.f32.mxu0 0.0
    %879 = vmatmul.mubr.f32.gmra.mrb[0].mxu0 %v663
    %v880 = vpop.f32.mrb[0].mxu0
    %v881 = vadd.f32 %v692, %v880
    %v882 = vpop.f32.mrb[0].mxu0
    %883 = vmatprep.mubr.f32.mxu0 0.0
    %884 = vmatmul.mubr.f32.gmra.mrb[0].mxu0 %v664
    %v885 = vpop.f32.mrb[0].mxu0
    %v886 = vadd.f32 %v692, %v885
    %v887 = vpop.f32.mrb[0].mxu0
    %888 = vmatprep.mubr.f32.mxu0 0.0
    %889 = vmatmul.mubr.f32.gmra.mrb[0].mxu0 %v665
    %v890 = vpop.f32.mrb[0].mxu0
    %v891 = vadd.f32 %v692, %v890
    %v892 = vpop.f32.mrb[0].mxu0
    %893 = vmatprep.mubr.f32.mxu0 0.0
    %894 = vmatmul.mubr.f32.gmra.mrb[0].mxu0 %v666
    %v895 = vpop.f32.mrb[0].mxu0
    %v896 = vadd.f32 %v692, %v895
    %v897 = vpop.f32.mrb[0].mxu0
    %898 = vmatprep.mubr.f32.mxu0 0.0
    %899 = vmatmul.mubr.f32.gmra.mrb[0].mxu0 %v667
    %v900 = vpop.f32.mrb[0].mxu0
    %v901 = vadd.f32 %v692, %v900
    %v902 = vpop.f32.mrb[0].mxu0
    %903 = vmatprep.mubr.f32.mxu0 0.0
    %904 = vmatmul.mubr.f32.gmra.mrb[0].mxu0 %v668
    %v905 = vpop.f32.mrb[0].mxu0
    %v906 = vadd.f32 %v692, %v905
    %v907 = vpop.f32.mrb[0].mxu0
    %908 = vmatprep.mubr.f32.mxu0 0.0
    %909 = vmatmul.mubr.f32.gmra.mrb[0].mxu0 %v669
    %v910 = vpop.f32.mrb[0].mxu0
    %v911 = vadd.f32 %v692, %v910
    %v912 = vpop.f32.mrb[0].mxu0
    %913 = vmatprep.mubr.f32.mxu0 0.0
    %914 = vmatmul.mubr.f32.gmra.mrb[0].mxu0 %v670
    %v915 = vpop.f32.mrb[0].mxu0
    %v916 = vadd.f32 %v692, %v915
    %v917 = vpop.f32.mrb[0].mxu0
    %918 = vdwg.mxu0
    %v919 = vlaneseq
    %v920 = vand.u32 %v919, 127
    %vm921 = vcmp.lt.s32.totalorder %v920, 8
    %v922 = vsel %vm921, %v761, -1e+30
    %v923 = vsel %vm921, %v766, -1e+30
    %v924 = vsel %vm921, %v771, -1e+30
    %v925 = vsel %vm921, %v776, -1e+30
    %v926 = vsel %vm921, %v781, -1e+30
    %v927 = vsel %vm921, %v786, -1e+30
    %v928 = vsel %vm921, %v791, -1e+30
    %v929 = vsel %vm921, %v796, -1e+30
    %v930 = vsel %vm921, %v801, -1e+30
    %v931 = vsel %vm921, %v806, -1e+30
    %v932 = vsel %vm921, %v811, -1e+30
    %v933 = vsel %vm921, %v816, -1e+30
    %v934 = vsel %vm921, %v821, -1e+30
    %v935 = vsel %vm921, %v826, -1e+30
    %v936 = vsel %vm921, %v831, -1e+30
    %v937 = vsel %vm921, %v836, -1e+30
    %v938 = vsel %vm921, %v841, -1e+30
    %v939 = vsel %vm921, %v846, -1e+30
    %v940 = vsel %vm921, %v851, -1e+30
    %v941 = vsel %vm921, %v856, -1e+30
    %v942 = vsel %vm921, %v861, -1e+30
    %v943 = vsel %vm921, %v866, -1e+30
    %v944 = vsel %vm921, %v871, -1e+30
    %v945 = vsel %vm921, %v876, -1e+30
    %v946 = vsel %vm921, %v881, -1e+30
    %v947 = vsel %vm921, %v886, -1e+30
    %v948 = vsel %vm921, %v891, -1e+30
    %v949 = vsel %vm921, %v896, -1e+30
    %v950 = vsel %vm921, %v901, -1e+30
    %v951 = vsel %vm921, %v906, -1e+30
    %v952 = vsel %vm921, %v911, -1e+30
    %v953 = vsel %vm921, %v916, -1e+30
    %954 = vmax.xlane.f32.xlu0 %v922
    %v955 = vpop.xlane.xlu0 %954
    %956 = vmax.xlane.f32.xlu0 %v923
    %v957 = vpop.xlane.xlu0 %956
    %958 = vmax.xlane.f32.xlu0 %v924
    %v959 = vpop.xlane.xlu0 %958
    %960 = vmax.xlane.f32.xlu0 %v925
    %v961 = vpop.xlane.xlu0 %960
    %962 = vmax.xlane.f32.xlu0 %v926
    %v963 = vpop.xlane.xlu0 %962
    %964 = vmax.xlane.f32.xlu0 %v927
    %v965 = vpop.xlane.xlu0 %964
    %966 = vmax.xlane.f32.xlu0 %v928
    %v967 = vpop.xlane.xlu0 %966
    %968 = vmax.xlane.f32.xlu0 %v929
    %v969 = vpop.xlane.xlu0 %968
    %970 = vmax.xlane.f32.xlu0 %v930
    %v971 = vpop.xlane.xlu0 %970
    %972 = vmax.xlane.f32.xlu0 %v931
    %v973 = vpop.xlane.xlu0 %972
    %974 = vmax.xlane.f32.xlu0 %v932
    %v975 = vpop.xlane.xlu0 %974
    %976 = vmax.xlane.f32.xlu0 %v933
    %v977 = vpop.xlane.xlu0 %976
    %978 = vmax.xlane.f32.xlu0 %v934
    %v979 = vpop.xlane.xlu0 %978
    %980 = vmax.xlane.f32.xlu0 %v935
    %v981 = vpop.xlane.xlu0 %980
    %982 = vmax.xlane.f32.xlu0 %v936
    %v983 = vpop.xlane.xlu0 %982
    %984 = vmax.xlane.f32.xlu0 %v937
    %v985 = vpop.xlane.xlu0 %984
    %986 = vmax.xlane.f32.xlu0 %v938
    %v987 = vpop.xlane.xlu0 %986
    %988 = vmax.xlane.f32.xlu0 %v939
    %v989 = vpop.xlane.xlu0 %988
    %990 = vmax.xlane.f32.xlu0 %v940
    %v991 = vpop.xlane.xlu0 %990
    %992 = vmax.xlane.f32.xlu0 %v941
    %v993 = vpop.xlane.xlu0 %992
    %994 = vmax.xlane.f32.xlu0 %v942
    %v995 = vpop.xlane.xlu0 %994
    %996 = vmax.xlane.f32.xlu0 %v943
    %v997 = vpop.xlane.xlu0 %996
    %998 = vmax.xlane.f32.xlu0 %v944
    %v999 = vpop.xlane.xlu0 %998
    %1000 = vmax.xlane.f32.xlu0 %v945
    %v1001 = vpop.xlane.xlu0 %1000
    %1002 = vmax.xlane.f32.xlu0 %v946
    %v1003 = vpop.xlane.xlu0 %1002
    %1004 = vmax.xlane.f32.xlu0 %v947
    %v1005 = vpop.xlane.xlu0 %1004
    %1006 = vmax.xlane.f32.xlu0 %v948
    %v1007 = vpop.xlane.xlu0 %1006
    %1008 = vmax.xlane.f32.xlu0 %v949
    %v1009 = vpop.xlane.xlu0 %1008
    %1010 = vmax.xlane.f32.xlu0 %v950
    %v1011 = vpop.xlane.xlu0 %1010
    %1012 = vmax.xlane.f32.xlu0 %v951
    %v1013 = vpop.xlane.xlu0 %1012
    %1014 = vmax.xlane.f32.xlu0 %v952
    %v1015 = vpop.xlane.xlu0 %1014
    %1016 = vmax.xlane.f32.xlu0 %v953
    %v1017 = vpop.xlane.xlu0 %1016
    %v1018 = vsub.f32 %v922, %v955
    %v1019 = vsub.f32 %v923, %v957
    %v1020 = vsub.f32 %v924, %v959
    %v1021 = vsub.f32 %v925, %v961
    %v1022 = vsub.f32 %v926, %v963
    %v1023 = vsub.f32 %v927, %v965
    %v1024 = vsub.f32 %v928, %v967
    %v1025 = vsub.f32 %v929, %v969
    %v1026 = vsub.f32 %v930, %v971
    %v1027 = vsub.f32 %v931, %v973
    %v1028 = vsub.f32 %v932, %v975
    %v1029 = vsub.f32 %v933, %v977
    %v1030 = vsub.f32 %v934, %v979
    %v1031 = vsub.f32 %v935, %v981
    %v1032 = vsub.f32 %v936, %v983
    %v1033 = vsub.f32 %v937, %v985
    %v1034 = vsub.f32 %v938, %v987
    %v1035 = vsub.f32 %v939, %v989
    %v1036 = vsub.f32 %v940, %v991
    %v1037 = vsub.f32 %v941, %v993
    %v1038 = vsub.f32 %v942, %v995
    %v1039 = vsub.f32 %v943, %v997
    %v1040 = vsub.f32 %v944, %v999
    %v1041 = vsub.f32 %v945, %v1001
    %v1042 = vsub.f32 %v946, %v1003
    %v1043 = vsub.f32 %v947, %v1005
    %v1044 = vsub.f32 %v948, %v1007
    %v1045 = vsub.f32 %v949, %v1009
    %v1046 = vsub.f32 %v950, %v1011
    %v1047 = vsub.f32 %v951, %v1013
    %v1048 = vsub.f32 %v952, %v1015
    %v1049 = vsub.f32 %v953, %v1017
    %v1050 = vmul.f32 %v1018, 1.442695
    %v1051 = vpow.pop %v1050
    %v1052 = vmul.f32 %v1019, 1.442695
    %v1053 = vpow.pop %v1052
    %v1054 = vmul.f32 %v1020, 1.442695
    %v1055 = vpow.pop %v1054
    %v1056 = vmul.f32 %v1021, 1.442695
    %v1057 = vpow.pop %v1056
    %v1058 = vmul.f32 %v1022, 1.442695
    %v1059 = vpow.pop %v1058
    %v1060 = vmul.f32 %v1023, 1.442695
    %v1061 = vpow.pop %v1060
    %v1062 = vmul.f32 %v1024, 1.442695
    %v1063 = vpow.pop %v1062
    %v1064 = vmul.f32 %v1025, 1.442695
    %v1065 = vpow.pop %v1064
    %v1066 = vmul.f32 %v1026, 1.442695
    %v1067 = vpow.pop %v1066
    %v1068 = vmul.f32 %v1027, 1.442695
    %v1069 = vpow.pop %v1068
    %v1070 = vmul.f32 %v1028, 1.442695
    %v1071 = vpow.pop %v1070
    %v1072 = vmul.f32 %v1029, 1.442695
    %v1073 = vpow.pop %v1072
    %v1074 = vmul.f32 %v1030, 1.442695
    %v1075 = vpow.pop %v1074
    %v1076 = vmul.f32 %v1031, 1.442695
    %v1077 = vpow.pop %v1076
    %v1078 = vmul.f32 %v1032, 1.442695
    %v1079 = vpow.pop %v1078
    %v1080 = vmul.f32 %v1033, 1.442695
    %v1081 = vpow.pop %v1080
    %v1082 = vmul.f32 %v1034, 1.442695
    %v1083 = vpow.pop %v1082
    %v1084 = vmul.f32 %v1035, 1.442695
    %v1085 = vpow.pop %v1084
    %v1086 = vmul.f32 %v1036, 1.442695
    %v1087 = vpow.pop %v1086
    %v1088 = vmul.f32 %v1037, 1.442695
    %v1089 = vpow.pop %v1088
    %v1090 = vmul.f32 %v1038, 1.442695
    %v1091 = vpow.pop %v1090
    %v1092 = vmul.f32 %v1039, 1.442695
    %v1093 = vpow.pop %v1092
    %v1094 = vmul.f32 %v1040, 1.442695
    %v1095 = vpow.pop %v1094
    %v1096 = vmul.f32 %v1041, 1.442695
    %v1097 = vpow.pop %v1096
    %v1098 = vmul.f32 %v1042, 1.442695
    %v1099 = vpow.pop %v1098
    %v1100 = vmul.f32 %v1043, 1.442695
    %v1101 = vpow.pop %v1100
    %v1102 = vmul.f32 %v1044, 1.442695
    %v1103 = vpow.pop %v1102
    %v1104 = vmul.f32 %v1045, 1.442695
    %v1105 = vpow.pop %v1104
    %v1106 = vmul.f32 %v1046, 1.442695
    %v1107 = vpow.pop %v1106
    %v1108 = vmul.f32 %v1047, 1.442695
    %v1109 = vpow.pop %v1108
    %v1110 = vmul.f32 %v1048, 1.442695
    %v1111 = vpow.pop %v1110
    %v1112 = vmul.f32 %v1049, 1.442695
    %v1113 = vpow.pop %v1112
    %1114 = vadd.xlane.f32.xlu0 %v1051
    %v1115 = vpop.xlane.xlu0 %1114
    %1116 = vadd.xlane.f32.xlu0 %v1053
    %v1117 = vpop.xlane.xlu0 %1116
    %1118 = vadd.xlane.f32.xlu0 %v1055
    %v1119 = vpop.xlane.xlu0 %1118
    %1120 = vadd.xlane.f32.xlu0 %v1057
    %v1121 = vpop.xlane.xlu0 %1120
    %1122 = vadd.xlane.f32.xlu0 %v1059
    %v1123 = vpop.xlane.xlu0 %1122
    %1124 = vadd.xlane.f32.xlu0 %v1061
    %v1125 = vpop.xlane.xlu0 %1124
    %1126 = vadd.xlane.f32.xlu0 %v1063
    %v1127 = vpop.xlane.xlu0 %1126
    %1128 = vadd.xlane.f32.xlu0 %v1065
    %v1129 = vpop.xlane.xlu0 %1128
    %1130 = vadd.xlane.f32.xlu0 %v1067
    %v1131 = vpop.xlane.xlu0 %1130
    %1132 = vadd.xlane.f32.xlu0 %v1069
    %v1133 = vpop.xlane.xlu0 %1132
    %1134 = vadd.xlane.f32.xlu0 %v1071
    %v1135 = vpop.xlane.xlu0 %1134
    %1136 = vadd.xlane.f32.xlu0 %v1073
    %v1137 = vpop.xlane.xlu0 %1136
    %1138 = vadd.xlane.f32.xlu0 %v1075
    %v1139 = vpop.xlane.xlu0 %1138
    %1140 = vadd.xlane.f32.xlu0 %v1077
    %v1141 = vpop.xlane.xlu0 %1140
    %1142 = vadd.xlane.f32.xlu0 %v1079
    %v1143 = vpop.xlane.xlu0 %1142
    %1144 = vadd.xlane.f32.xlu0 %v1081
    %v1145 = vpop.xlane.xlu0 %1144
    %1146 = vadd.xlane.f32.xlu0 %v1083
    %v1147 = vpop.xlane.xlu0 %1146
    %1148 = vadd.xlane.f32.xlu0 %v1085
    %v1149 = vpop.xlane.xlu0 %1148
    %1150 = vadd.xlane.f32.xlu0 %v1087
    %v1151 = vpop.xlane.xlu0 %1150
    %1152 = vadd.xlane.f32.xlu0 %v1089
    %v1153 = vpop.xlane.xlu0 %1152
    %1154 = vadd.xlane.f32.xlu0 %v1091
    %v1155 = vpop.xlane.xlu0 %1154
    %1156 = vadd.xlane.f32.xlu0 %v1093
    %v1157 = vpop.xlane.xlu0 %1156
    %1158 = vadd.xlane.f32.xlu0 %v1095
    %v1159 = vpop.xlane.xlu0 %1158
    %1160 = vadd.xlane.f32.xlu0 %v1097
    %v1161 = vpop.xlane.xlu0 %1160
    %1162 = vadd.xlane.f32.xlu0 %v1099
    %v1163 = vpop.xlane.xlu0 %1162
    %1164 = vadd.xlane.f32.xlu0 %v1101
    %v1165 = vpop.xlane.xlu0 %1164
    %1166 = vadd.xlane.f32.xlu0 %v1103
    %v1167 = vpop.xlane.xlu0 %1166
    %1168 = vadd.xlane.f32.xlu0 %v1105
    %v1169 = vpop.xlane.xlu0 %1168
    %1170 = vadd.xlane.f32.xlu0 %v1107
    %v1171 = vpop.xlane.xlu0 %1170
    %1172 = vadd.xlane.f32.xlu0 %v1109
    %v1173 = vpop.xlane.xlu0 %1172
    %1174 = vadd.xlane.f32.xlu0 %v1111
    %v1175 = vpop.xlane.xlu0 %1174
    %1176 = vadd.xlane.f32.xlu0 %v1113
    %v1177 = vpop.xlane.xlu0 %1176
    %v1178 = vlog2.pop %v1115
    %v1179 = vmul.f32 %v1178, 0.6931472
    %v1180 = vlog2.pop %v1117
    %v1181 = vmul.f32 %v1180, 0.6931472
    %v1182 = vlog2.pop %v1119
    %v1183 = vmul.f32 %v1182, 0.6931472
    %v1184 = vlog2.pop %v1121
    %v1185 = vmul.f32 %v1184, 0.6931472
    %v1186 = vlog2.pop %v1123
    %v1187 = vmul.f32 %v1186, 0.6931472
    %v1188 = vlog2.pop %v1125
    %v1189 = vmul.f32 %v1188, 0.6931472
    %v1190 = vlog2.pop %v1127
    %v1191 = vmul.f32 %v1190, 0.6931472
    %v1192 = vlog2.pop %v1129
    %v1193 = vmul.f32 %v1192, 0.6931472
    %v1194 = vlog2.pop %v1131
    %v1195 = vmul.f32 %v1194, 0.6931472
    %v1196 = vlog2.pop %v1133
    %v1197 = vmul.f32 %v1196, 0.6931472
    %v1198 = vlog2.pop %v1135
    %v1199 = vmul.f32 %v1198, 0.6931472
    %v1200 = vlog2.pop %v1137
    %v1201 = vmul.f32 %v1200, 0.6931472
    %v1202 = vlog2.pop %v1139
    %v1203 = vmul.f32 %v1202, 0.6931472
    %v1204 = vlog2.pop %v1141
    %v1205 = vmul.f32 %v1204, 0.6931472
    %v1206 = vlog2.pop %v1143
    %v1207 = vmul.f32 %v1206, 0.6931472
    %v1208 = vlog2.pop %v1145
    %v1209 = vmul.f32 %v1208, 0.6931472
    %v1210 = vlog2.pop %v1147
    %v1211 = vmul.f32 %v1210, 0.6931472
    %v1212 = vlog2.pop %v1149
    %v1213 = vmul.f32 %v1212, 0.6931472
    %v1214 = vlog2.pop %v1151
    %v1215 = vmul.f32 %v1214, 0.6931472
    %v1216 = vlog2.pop %v1153
    %v1217 = vmul.f32 %v1216, 0.6931472
    %v1218 = vlog2.pop %v1155
    %v1219 = vmul.f32 %v1218, 0.6931472
    %v1220 = vlog2.pop %v1157
    %v1221 = vmul.f32 %v1220, 0.6931472
    %v1222 = vlog2.pop %v1159
    %v1223 = vmul.f32 %v1222, 0.6931472
    %v1224 = vlog2.pop %v1161
    %v1225 = vmul.f32 %v1224, 0.6931472
    %v1226 = vlog2.pop %v1163
    %v1227 = vmul.f32 %v1226, 0.6931472
    %v1228 = vlog2.pop %v1165
    %v1229 = vmul.f32 %v1228, 0.6931472
    %v1230 = vlog2.pop %v1167
    %v1231 = vmul.f32 %v1230, 0.6931472
    %v1232 = vlog2.pop %v1169
    %v1233 = vmul.f32 %v1232, 0.6931472
    %v1234 = vlog2.pop %v1171
    %v1235 = vmul.f32 %v1234, 0.6931472
    %v1236 = vlog2.pop %v1173
    %v1237 = vmul.f32 %v1236, 0.6931472
    %v1238 = vlog2.pop %v1175
    %v1239 = vmul.f32 %v1238, 0.6931472
    %v1240 = vlog2.pop %v1177
    %v1241 = vmul.f32 %v1240, 0.6931472
    %v1242 = vsub.f32 %v1018, %v1179
    %v1243 = vsub.f32 %v1019, %v1181
    %v1244 = vsub.f32 %v1020, %v1183
    %v1245 = vsub.f32 %v1021, %v1185
    %v1246 = vsub.f32 %v1022, %v1187
    %v1247 = vsub.f32 %v1023, %v1189
    %v1248 = vsub.f32 %v1024, %v1191
    %v1249 = vsub.f32 %v1025, %v1193
    %v1250 = vsub.f32 %v1026, %v1195
    %v1251 = vsub.f32 %v1027, %v1197
    %v1252 = vsub.f32 %v1028, %v1199
    %v1253 = vsub.f32 %v1029, %v1201
    %v1254 = vsub.f32 %v1030, %v1203
    %v1255 = vsub.f32 %v1031, %v1205
    %v1256 = vsub.f32 %v1032, %v1207
    %v1257 = vsub.f32 %v1033, %v1209
    %v1258 = vsub.f32 %v1034, %v1211
    %v1259 = vsub.f32 %v1035, %v1213
    %v1260 = vsub.f32 %v1036, %v1215
    %v1261 = vsub.f32 %v1037, %v1217
    %v1262 = vsub.f32 %v1038, %v1219
    %v1263 = vsub.f32 %v1039, %v1221
    %v1264 = vsub.f32 %v1040, %v1223
    %v1265 = vsub.f32 %v1041, %v1225
    %v1266 = vsub.f32 %v1042, %v1227
    %v1267 = vsub.f32 %v1043, %v1229
    %v1268 = vsub.f32 %v1044, %v1231
    %v1269 = vsub.f32 %v1045, %v1233
    %v1270 = vsub.f32 %v1046, %v1235
    %v1271 = vsub.f32 %v1047, %v1237
    %v1272 = vsub.f32 %v1048, %v1239
    %v1273 = vsub.f32 %v1049, %v1241
    %1274 = vst [vmem:[%s4] sm:$0xff] %v1242
    %1275 = vst [vmem:[%s4 + $0x8] sm:$0xff] %v1243
    %1276 = vst [vmem:[%s4 + $0x10] sm:$0xff] %v1244
    %1277 = vst [vmem:[%s4 + $0x18] sm:$0xff] %v1245
    %1278 = vst [vmem:[%s4 + $0x20] sm:$0xff] %v1246
    %1279 = vst [vmem:[%s4 + $0x28] sm:$0xff] %v1247
    %1280 = vst [vmem:[%s4 + $0x30] sm:$0xff] %v1248
    %1281 = vst [vmem:[%s4 + $0x38] sm:$0xff] %v1249
    %1282 = vst [vmem:[%s4 + $0x40] sm:$0xff] %v1250
    %1283 = vst [vmem:[%s4 + $0x48] sm:$0xff] %v1251
    %1284 = vst [vmem:[%s4 + $0x50] sm:$0xff] %v1252
    %1285 = vst [vmem:[%s4 + $0x58] sm:$0xff] %v1253
    %1286 = vst [vmem:[%s4 + $0x60] sm:$0xff] %v1254
    %1287 = vst [vmem:[%s4 + $0x68] sm:$0xff] %v1255
    %1288 = vst [vmem:[%s4 + $0x70] sm:$0xff] %v1256
    %1289 = vst [vmem:[%s4 + $0x78] sm:$0xff] %v1257
    %1290 = vst [vmem:[%s4 + $0x80] sm:$0xff] %v1258
    %1291 = vst [vmem:[%s4 + $0x88] sm:$0xff] %v1259
    %1292 = vst [vmem:[%s4 + $0x90] sm:$0xff] %v1260
    %1293 = vst [vmem:[%s4 + $0x98] sm:$0xff] %v1261
    %1294 = vst [vmem:[%s4 + $0xa0] sm:$0xff] %v1262
    %1295 = vst [vmem:[%s4 + $0xa8] sm:$0xff] %v1263
    %1296 = vst [vmem:[%s4 + $0xb0] sm:$0xff] %v1264
    %1297 = vst [vmem:[%s4 + $0xb8] sm:$0xff] %v1265
    %1298 = vst [vmem:[%s4 + $0xc0] sm:$0xff] %v1266
    %1299 = vst [vmem:[%s4 + $0xc8] sm:$0xff] %v1267
    %1300 = vst [vmem:[%s4 + $0xd0] sm:$0xff] %v1268
    %1301 = vst [vmem:[%s4 + $0xd8] sm:$0xff] %v1269
    %1302 = vst [vmem:[%s4 + $0xe0] sm:$0xff] %v1270
    %1303 = vst [vmem:[%s4 + $0xe8] sm:$0xff] %v1271
    %1304 = vst [vmem:[%s4 + $0xf0] sm:$0xff] %v1272
    %1305 = vst [vmem:[%s4 + $0xf8] sm:$0xff] %v1273
  $region25: #{sgc_forward.5} parent=0 // pred_fallthru
    _
  // Predicated region
  $region26: #{sgc_forward.5} parent=0 // pred_check
    _
  $region27: #{sgc_forward.5} parent=0 // pred_check_branch
    %1307 = sbr.rel (0) target = $region29
  $region28: #{sgc_forward.5} parent=0 // pred_region
    _
  $region29: #{sgc_forward.5} parent=0 // pred_fallthru
    _
  // Predicated region
  $region30: #{sgc_forward.5} parent=0 // pred_check
    _
  $region31: #{sgc_forward.5} parent=0 // pred_check_branch
    %1309 = sbr.rel (0) target = $region33
  $region32: #{sgc_forward.5} parent=0 // pred_region
    _
  $region33: #{sgc_forward.5} parent=0 // pred_fallthru
    _

</llo_original>
